<compile_context>
chip_gen: v7x
topology: tpu7x:2x2x1
jax: 0.10.0
libtpu: 0.0.40
codegen_flags: <defaults>
</compile_context>

<pallas_src>
import functools

import jax
import jax.numpy as jnp
import numpy as np
from jax import lax
from jax.experimental import pallas as pl
from jax.experimental.pallas import tpu as pltpu

# ----------------------------- config (CFG) ---------------------------------
PATCH = 8          # patch size of the synthetic patch-embed backbone
D = 32             # embedding dim
NUM_REG = 4        # number of register tokens
K = 1 + NUM_REG    # cue tokens: cls + registers
ROI_SIDE = 3       # CFG.roi_side
R_RAD = ROI_SIDE // 2


def _l2norm_kernel(t):
    # x / max(||x||, 1e-12) expressed as x * rsqrt(max(||x||^2, 1e-24)): the
    # rsqrt goes to the EUP slot, dropping the VPU divide.
    ss = jnp.sum(t * t, axis=-1, keepdims=True)
    return t * lax.rsqrt(jnp.maximum(ss, 1e-24))


def _l2norm_ref(t):
    # torch.nn.functional.normalize(dim=-1): x / max(||x||_2, 1e-12)
    n = jnp.sqrt(jnp.sum(t * t, axis=-1, keepdims=True))
    return t / jnp.maximum(n, 1e-12)


# ----------------------------- fused Pallas kernel ---------------------------
def _fused_kernel(xp_ref, w_ref, b_ref, cue_base_ref, cue_scale_ref,
                  cues_out_ref, roi_out_ref, *, Hp, Wp, BB):
    # xp_ref:        (BB, N, Cin) bf16  patchified images for BB batch elements
    # w_ref:         (Cin, D)     bf16  patch-embed projection (resident)
    # b_ref:         (1, D)       f32   patch-embed bias
    # cue_base_ref:  (K, D)       f32   [cls_token ; reg_tokens]
    # cue_scale_ref: (K, D)       f32   [1.0 ; 0.1 ...] broadcast over D
    # cues_out_ref:  (BB, K, D)   f32   normalized cue tokens
    # roi_out_ref:   (BB, K, D)   f32   normalized ROI tokens
    N = Hp * Wp
    Cin = xp_ref.shape[-1]
    d = w_ref.shape[-1]

    # ---- patch embedding on the MXU (bf16 x bf16 -> f32 accumulate);
    #      patches never leave VMEM ------------------------------------------
    xp = xp_ref[...].reshape(BB * N, Cin)                 # leading-dim merge only
    pf = jnp.dot(xp, w_ref[...], preferred_element_type=jnp.float32) + b_ref[...]
    patches = pf.reshape(BB, N, d)                        # (BB, N, D) f32

    # ---- synthetic backbone tokens: cue = base + scale * mean(patches) ------
    # direct sublane reduction (XLU) instead of BB M=1 matmuls
    mean_p = jnp.mean(patches, axis=1, keepdims=True)                # (BB, 1, D)
    cues = (cue_base_ref[...][None, :, :]
            + cue_scale_ref[...][None, :, :] * mean_p)               # (BB, K, D)

    # ---- buddy pooling: sim -> argmax -> clamped-ROI pool (masked matmul) ----
    sim = jnp.einsum("bkd,bnd->bkn", cues, patches,
                     preferred_element_type=jnp.float32)             # (BB, K, N)

    # first maximal index over the flattened patch grid (== torch.argmax)
    n_iota = lax.broadcasted_iota(jnp.int32, (BB, K, N), 2)
    max_val = jnp.max(sim, axis=-1, keepdims=True)
    idx = jnp.min(jnp.where(sim == max_val, n_iota, N),
                  axis=-1, keepdims=True)                            # (BB, K, 1)

    # h = idx // Wp, w = idx % Wp  (Wp power of two -> shifts/ands)
    log2w = Wp.bit_length() - 1
    h = idx >> log2w
    w = idx & (Wp - 1)
    row = n_iota >> log2w
    col = n_iota & (Wp - 1)

    # clamped ROI [h-r, h+r] x [w-r, w+r] as a mask (clamping == staying on-grid)
    mask = ((row >= h - R_RAD) & (row <= h + R_RAD) &
            (col >= w - R_RAD) & (col <= w + R_RAD))
    mask_f = mask.astype(jnp.float32)                                # (BB, K, N)
    # NOTE: no `/count` — the ROI token is L2-normalized below, so the positive
    # per-(b,k) scale cancels exactly.
    roi = jnp.einsum("bkn,bnd->bkd", mask_f, patches,
                     preferred_element_type=jnp.float32)             # (BB, K, D)

    # two aligned full-block stores (no mid-sublane write at token index K=5)
    cues_out_ref[...] = _l2norm_kernel(cues)
    roi_out_ref[...] = _l2norm_kernel(roi)


# ----------------------------- tiling / VMEM sizing --------------------------
def _tpu_physical_vmem_bytes():
    try:
        return int(getattr(pltpu.get_tpu_info(), "vmem_capacity_bytes"))
    except Exception:
        return 64 * 1024 * 1024      # v7x physical VMEM; safe lower bound everywhere


def _choose_tiling(B, N, Cin):
    phys = _tpu_physical_vmem_bytes()
    # scoped limit with headroom below physical:
    #   v5e/v6e (128 MiB) -> 96 MiB ; v7x (64 MiB, also the fallback) -> 48 MiB
    vmem_limit = min(phys * 3 // 4, 96 * 1024 * 1024)
    tile_budget = int(vmem_limit * 0.7)

    # rough per-batch-element VMEM bytes for one grid step
    per_b = (2 * N * Cin * 2       # double-buffered streamed bf16 xp block
             + N * Cin * 2         # kernel-local copy of the tile
             + N * D * 4           # f32 patches
             + 6 * K * N * 4)      # sim / iota / mask temporaries
    bb_cap = max(1, tile_budget // max(per_b, 1))
    # keep >= 2 grid steps so the "parallel" axis feeds both v7x TensorCores
    # (negligible cost on single-TC v5e/v6e: ~0.35 us extra per step)
    bb_cap = min(bb_cap, max(1, B // 2))

    BB = 1
    for bb in range(1, int(bb_cap) + 1):
        if B % bb == 0:
            BB = bb
    return int(vmem_limit), BB


# ----------------------------- wrapper ---------------------------------------
def multivector_encoder(x, params):
    B, C, H, W = x.shape
    Hp, Wp = H // PATCH, W // PATCH
    N = Hp * Wp
    Cin = C * PATCH * PATCH
    assert (Wp & (Wp - 1)) == 0, "patch-grid width must be a power of two"
    assert N % 8 == 0, "patch count per image must be sublane-aligned"

    # patchify NCHW -> (B, N, Cin), cast fused into the transpose so the extra
    # HBM pass is bf16-sized.
    # TODO(synk): fold this patchify into the kernel (needs an im2col relayout
    # that rectangular BlockSpecs / in-kernel reshapes don't express robustly)
    # to drop the remaining extra HBM pass at DINOv2-scale resolutions.
    xp = (x.reshape(B, C, Hp, PATCH, Wp, PATCH)
           .transpose(0, 2, 4, 1, 3, 5)
           .reshape(B, N, Cin)
           .astype(jnp.bfloat16))

    # cue = cue_base + cue_scale * mean(patches)
    #   row 0: cls_token + 1.0*mean   |   rows 1..R: reg_tokens + 0.1*mean
    cue_base = jnp.concatenate(
        [params["cls_token"][None, :], params["reg_tokens"]], axis=0)       # (K, D)
    cue_scale = jnp.concatenate(
        [jnp.ones((1,), jnp.float32), jnp.full((NUM_REG,), 0.1, jnp.float32)])
    cue_scale = jnp.broadcast_to(cue_scale[:, None], (K, D)).astype(jnp.float32)

    vmem_limit, BB = _choose_tiling(B, N, Cin)

    kernel = functools.partial(_fused_kernel, Hp=Hp, Wp=Wp, BB=BB)
    w_bf = params["w_embed"].astype(jnp.bfloat16)
    b2 = params["b_embed"].reshape(1, D).astype(jnp.float32)

    cues_n, roi_n = pl.pallas_call(
        kernel,
        out_shape=(jax.ShapeDtypeStruct((B, K, D), jnp.float32),
                   jax.ShapeDtypeStruct((B, K, D), jnp.float32)),
        grid=(B // BB,),
        in_specs=[
            pl.BlockSpec((BB, N, Cin), lambda i: (i, 0, 0)),   # streamed per step (bf16)
            pl.BlockSpec((Cin, D), lambda i: (0, 0)),          # resident weights (bf16)
            pl.BlockSpec((1, D), lambda i: (0, 0)),
            pl.BlockSpec((K, D), lambda i: (0, 0)),
            pl.BlockSpec((K, D), lambda i: (0, 0)),
        ],
        out_specs=(
            pl.BlockSpec((BB, K, D), lambda i: (i, 0, 0)),
            pl.BlockSpec((BB, K, D), lambda i: (i, 0, 0)),
        ),
        compiler_params=pltpu.CompilerParams(
            dimension_semantics=("parallel",),
            vmem_limit_bytes=vmem_limit,
        ),
    )(xp, w_bf, b2, cue_base, cue_scale)

    # tokens = [cues ; rois], already L2-normalized per token (normalize is per-row)
    return jnp.concatenate([cues_n, roi_n], axis=1)        # (B, 2K, D)


# ----------------------------- pure-JAX reference ----------------------------
def _reference(x, params):
    B, C, H, W = x.shape
    Hp, Wp = H // PATCH, W // PATCH
    N = Hp * Wp
    Cin = C * PATCH * PATCH
    xp = (x.reshape(B, C, Hp, PATCH, Wp, PATCH)
           .transpose(0, 2, 4, 1, 3, 5)
           .reshape(B, N, Cin))
    # same bf16 patch-embed inputs as the kernel (f32 accumulation)
    patches = (jnp.dot(xp.astype(jnp.bfloat16).reshape(B * N, Cin),
                       params["w_embed"].astype(jnp.bfloat16),
                       preferred_element_type=jnp.float32)
               + params["b_embed"]).reshape(B, N, D)
    mean_p = jnp.mean(patches, axis=1)                                  # (B, D)
    cls = params["cls_token"][None, :] + mean_p
    regs = params["reg_tokens"][None, :, :] + 0.1 * mean_p[:, None, :]
    cues = jnp.concatenate([cls[:, None, :], regs], axis=1)             # (B, K, D)
    sim = jnp.einsum("bkd,bnd->bkn", cues, patches)
    idx = jnp.argmax(sim, axis=-1)                                      # (B, K)
    h, w = idx // Wp, idx % Wp
    n = jnp.arange(N)
    row, col = (n // Wp)[None, None, :], (n % Wp)[None, None, :]
    mask = ((row >= (h - R_RAD)[..., None]) & (row <= (h + R_RAD)[..., None]) &
            (col >= (w - R_RAD)[..., None]) & (col <= (w + R_RAD)[..., None]))
    mask_f = mask.astype(jnp.float32)
    roi = (jnp.einsum("bkn,bnd->bkd", mask_f, patches)
           / jnp.sum(mask_f, axis=-1, keepdims=True))
    toks = jnp.concatenate([cues, roi], axis=1)
    return _l2norm_ref(toks)


# ----------------------------- main ------------------------------------------
if __name__ == "__main__":
    key = jax.random.PRNGKey(0)
    B, C, Himg, Wimg = 16, 3, 32, 32            # -> 4x4 patch grid, N=16, BB=8, grid=(2,)
    ks = jax.random.split(key, 5)
    x = jax.random.normal(ks[0], (B, C, Himg, Wimg), jnp.float32)

    Cin = C * PATCH * PATCH
    params = dict(
        w_embed=0.05 * jax.random.normal(ks[1], (Cin, D), jnp.float32),
        b_embed=0.01 * jax.random.normal(ks[2], (D,), jnp.float32),
        cls_token=jax.random.normal(ks[3], (D,), jnp.float32),
        reg_tokens=jax.random.normal(ks[4], (NUM_REG, D), jnp.float32),
    )

    out = jax.jit(multivector_encoder)(x, params)
    jax.block_until_ready(out)

    ref = _reference(x, params)
    np.testing.assert_allclose(np.asarray(out), np.asarray(ref),
                               rtol=1e-3, atol=1e-3)
    assert out.shape == (B, 2 * K, D)
    print("KERNEL_OK")
</pallas_src>

<mosaic_0001>
module attributes {stable_mosaic.version = 11 : i64} {
  func.func @_fused_kernel(%arg0: i32, %arg1: memref<8x16x192xbf16, #tpu.memory_space<vmem>>, %arg2: memref<192x32xbf16, #tpu.memory_space<vmem>>, %arg3: memref<1x32xf32, #tpu.memory_space<vmem>>, %arg4: memref<5x32xf32, #tpu.memory_space<vmem>>, %arg5: memref<5x32xf32, #tpu.memory_space<vmem>>, %arg6: memref<8x5x32xf32, #tpu.memory_space<vmem>>, %arg7: memref<8x5x32xf32, #tpu.memory_space<vmem>>) attributes {dimension_semantics = [#tpu.dimension_semantics<parallel>], iteration_bounds = array<i64: 2>, scalar_prefetch = 0 : i64, scratch_operands = 0 : i64, tpu.core_type = #tpu.core_type<tc>, window_params = [{transform_indices = @transform_0, window_bounds = array<i64: 8, 16, 192>}, {pipeline_mode = #tpu.pipeline_mode<synchronous>, transform_indices = @transform_1, window_bounds = array<i64: 192, 32>}, {pipeline_mode = #tpu.pipeline_mode<synchronous>, transform_indices = @transform_2, window_bounds = array<i64: 1, 32>}, {pipeline_mode = #tpu.pipeline_mode<synchronous>, transform_indices = @transform_3, window_bounds = array<i64: 5, 32>}, {pipeline_mode = #tpu.pipeline_mode<synchronous>, transform_indices = @transform_4, window_bounds = array<i64: 5, 32>}, {transform_indices = @transform_5, window_bounds = array<i64: 8, 5, 32>}, {transform_indices = @transform_6, window_bounds = array<i64: 8, 5, 32>}]} {
    %c0 = arith.constant 0 : index
    %c0_0 = arith.constant 0 : index
    %c0_1 = arith.constant 0 : index
    %0 = vector.load %arg1[%c0, %c0_0, %c0_1] : memref<8x16x192xbf16, #tpu.memory_space<vmem>>, vector<8x16x192xbf16>
    %1 = vector.shape_cast %0 : vector<8x16x192xbf16> to vector<128x192xbf16>
    %c0_2 = arith.constant 0 : index
    %c0_3 = arith.constant 0 : index
    %2 = vector.load %arg2[%c0_2, %c0_3] : memref<192x32xbf16, #tpu.memory_space<vmem>>, vector<192x32xbf16>
    %cst = arith.constant dense<0.000000e+00> : vector<128x32xf32>
    %3 = tpu.matmul %1, %2, %cst {dimension_numbers = #tpu.dot_dimension_numbers<[1], [0], [0], [1], [0, 0, 1, 1], [], []>} : vector<128x192xbf16>, vector<192x32xbf16>, vector<128x32xf32> -> vector<128x32xf32>
    %c0_4 = arith.constant 0 : index
    %c0_5 = arith.constant 0 : index
    %4 = vector.load %arg3[%c0_4, %c0_5] : memref<1x32xf32, #tpu.memory_space<vmem>>, vector<1x32xf32>
    %5 = vector.broadcast %4 : vector<1x32xf32> to vector<128x32xf32>
    %6 = arith.addf %3, %5 : vector<128x32xf32>
    %7 = vector.shape_cast %6 : vector<128x32xf32> to vector<8x16x32xf32>
    %cst_6 = arith.constant dense<0.000000e+00> : vector<8x32xf32>
    %8 = vector.multi_reduction <add>, %7, %cst_6 [1] : vector<8x16x32xf32> to vector<8x32xf32>
    %9 = vector.shape_cast %8 : vector<8x32xf32> to vector<8x1x32xf32>
    %cst_7 = arith.constant 1.600000e+01 : f32
    %10 = vector.broadcast %cst_7 : f32 to vector<8x1x32xf32>
    %11 = arith.divf %9, %10 : vector<8x1x32xf32>
    %c0_8 = arith.constant 0 : index
    %c0_9 = arith.constant 0 : index
    %12 = vector.load %arg4[%c0_8, %c0_9] : memref<5x32xf32, #tpu.memory_space<vmem>>, vector<5x32xf32>
    %13 = vector.shape_cast %12 : vector<5x32xf32> to vector<1x5x32xf32>
    %c0_10 = arith.constant 0 : index
    %c0_11 = arith.constant 0 : index
    %14 = vector.load %arg5[%c0_10, %c0_11] : memref<5x32xf32, #tpu.memory_space<vmem>>, vector<5x32xf32>
    %15 = vector.shape_cast %14 : vector<5x32xf32> to vector<1x5x32xf32>
    %16 = vector.broadcast %15 : vector<1x5x32xf32> to vector<8x5x32xf32>
    %17 = vector.broadcast %11 : vector<8x1x32xf32> to vector<8x5x32xf32>
    %18 = arith.mulf %16, %17 : vector<8x5x32xf32>
    %19 = vector.broadcast %13 : vector<1x5x32xf32> to vector<8x5x32xf32>
    %20 = arith.addf %19, %18 : vector<8x5x32xf32>
    "tpu.trace_start"() <{level = 10 : i32, message = "bkd,bnd->bkn"}> : () -> ()
    %cst_12 = arith.constant dense<0.000000e+00> : vector<8x5x16xf32>
    %21 = tpu.matmul %20, %7, %cst_12 {dimension_numbers = #tpu.dot_dimension_numbers<[2], [2], [1], [1], [0, 0, 0, 1, 1, 1], [0], [0]>} : vector<8x5x32xf32>, vector<8x16x32xf32>, vector<8x5x16xf32> -> vector<8x5x16xf32>
    "tpu.trace_stop"() : () -> ()
    %22 = tpu.iota {dimensions = array<i32: 2>} : vector<8x5x16xi32>
    %cst_13 = arith.constant dense<0xFF800000> : vector<8x5xf32>
    %23 = vector.multi_reduction <maximumf>, %21, %cst_13 [2] : vector<8x5x16xf32> to vector<8x5xf32>
    %24 = vector.shape_cast %23 : vector<8x5xf32> to vector<8x5x1xf32>
    %25 = vector.broadcast %24 : vector<8x5x1xf32> to vector<8x5x16xf32>
    %26 = arith.cmpf oeq, %21, %25 : vector<8x5x16xf32>
    %c16_i32 = arith.constant 16 : i32
    %27 = vector.broadcast %c16_i32 : i32 to vector<8x5x16xi32>
    %28 = arith.select %26, %22, %27 : vector<8x5x16xi1>, vector<8x5x16xi32>
    %cst_14 = arith.constant dense<2147483647> : vector<8x5xi32>
    %29 = vector.multi_reduction <minsi>, %28, %cst_14 [2] : vector<8x5x16xi32> to vector<8x5xi32>
    %30 = vector.shape_cast %29 : vector<8x5xi32> to vector<8x5x1xi32>
    %c2_i32 = arith.constant 2 : i32
    %31 = vector.broadcast %c2_i32 : i32 to vector<8x5x1xi32>
    %32 = arith.shrsi %30, %31 : vector<8x5x1xi32>
    %c3_i32 = arith.constant 3 : i32
    %33 = vector.broadcast %c3_i32 : i32 to vector<8x5x1xi32>
    %34 = arith.andi %30, %33 : vector<8x5x1xi32>
    %c2_i32_15 = arith.constant 2 : i32
    %35 = vector.broadcast %c2_i32_15 : i32 to vector<8x5x16xi32>
    %36 = arith.shrsi %22, %35 : vector<8x5x16xi32>
    %c3_i32_16 = arith.constant 3 : i32
    %37 = vector.broadcast %c3_i32_16 : i32 to vector<8x5x16xi32>
    %38 = arith.andi %22, %37 : vector<8x5x16xi32>
    %c1_i32 = arith.constant 1 : i32
    %39 = vector.broadcast %c1_i32 : i32 to vector<8x5x1xi32>
    %40 = arith.subi %32, %39 : vector<8x5x1xi32>
    %41 = vector.broadcast %40 : vector<8x5x1xi32> to vector<8x5x16xi32>
    %42 = arith.cmpi sge, %36, %41 : vector<8x5x16xi32>
    %c1_i32_17 = arith.constant 1 : i32
    %43 = vector.broadcast %c1_i32_17 : i32 to vector<8x5x1xi32>
    %44 = arith.addi %32, %43 : vector<8x5x1xi32>
    %45 = vector.broadcast %44 : vector<8x5x1xi32> to vector<8x5x16xi32>
    %46 = arith.cmpi sle, %36, %45 : vector<8x5x16xi32>
    %47 = arith.andi %42, %46 : vector<8x5x16xi1>
    %c1_i32_18 = arith.constant 1 : i32
    %48 = vector.broadcast %c1_i32_18 : i32 to vector<8x5x1xi32>
    %49 = arith.subi %34, %48 : vector<8x5x1xi32>
    %50 = vector.broadcast %49 : vector<8x5x1xi32> to vector<8x5x16xi32>
    %51 = arith.cmpi sge, %38, %50 : vector<8x5x16xi32>
    %52 = arith.andi %47, %51 : vector<8x5x16xi1>
    %c1_i32_19 = arith.constant 1 : i32
    %53 = vector.broadcast %c1_i32_19 : i32 to vector<8x5x1xi32>
    %54 = arith.addi %34, %53 : vector<8x5x1xi32>
    %55 = vector.broadcast %54 : vector<8x5x1xi32> to vector<8x5x16xi32>
    %56 = arith.cmpi sle, %38, %55 : vector<8x5x16xi32>
    %57 = arith.andi %52, %56 : vector<8x5x16xi1>
    %58 = arith.extui %57 : vector<8x5x16xi1> to vector<8x5x16xi32>
    %59 = arith.sitofp %58 : vector<8x5x16xi32> to vector<8x5x16xf32>
    "tpu.trace_start"() <{level = 10 : i32, message = "bkn,bnd->bkd"}> : () -> ()
    %cst_20 = arith.constant dense<0.000000e+00> : vector<8x5x32xf32>
    %60 = tpu.matmul %59, %7, %cst_20 {dimension_numbers = #tpu.dot_dimension_numbers<[2], [1], [1], [2], [0, 0, 0, 1, 1, 2], [0], [0]>} : vector<8x5x16xf32>, vector<8x16x32xf32>, vector<8x5x32xf32> -> vector<8x5x32xf32>
    "tpu.trace_stop"() : () -> ()
    %61 = arith.mulf %20, %20 : vector<8x5x32xf32>
    %cst_21 = arith.constant dense<0.000000e+00> : vector<8x5xf32>
    %62 = vector.multi_reduction <add>, %61, %cst_21 [2] : vector<8x5x32xf32> to vector<8x5xf32>
    %63 = vector.shape_cast %62 : vector<8x5xf32> to vector<8x5x1xf32>
    %cst_22 = arith.constant 1.000000e-24 : f32
    %64 = vector.broadcast %cst_22 : f32 to vector<8x5x1xf32>
    %65 = arith.maximumf %63, %64 : vector<8x5x1xf32>
    %66 = math.rsqrt %65 : vector<8x5x1xf32>
    %67 = vector.broadcast %66 : vector<8x5x1xf32> to vector<8x5x32xf32>
    %68 = arith.mulf %20, %67 : vector<8x5x32xf32>
    %c0_23 = arith.constant 0 : index
    %c0_24 = arith.constant 0 : index
    %c0_25 = arith.constant 0 : index
    %69 = vector.load %arg6[%c0_23, %c0_24, %c0_25] : memref<8x5x32xf32, #tpu.memory_space<vmem>>, vector<8x5x32xf32>
    tpu.vector_store %arg6[%c0_23, %c0_24, %c0_25], %68 {strides = array<i32>} : memref<8x5x32xf32, #tpu.memory_space<vmem>>, vector<8x5x32xf32>,
    %70 = arith.mulf %60, %60 : vector<8x5x32xf32>
    %cst_26 = arith.constant dense<0.000000e+00> : vector<8x5xf32>
    %71 = vector.multi_reduction <add>, %70, %cst_26 [2] : vector<8x5x32xf32> to vector<8x5xf32>
    %72 = vector.shape_cast %71 : vector<8x5xf32> to vector<8x5x1xf32>
    %cst_27 = arith.constant 1.000000e-24 : f32
    %73 = vector.broadcast %cst_27 : f32 to vector<8x5x1xf32>
    %74 = arith.maximumf %72, %73 : vector<8x5x1xf32>
    %75 = math.rsqrt %74 : vector<8x5x1xf32>
    %76 = vector.broadcast %75 : vector<8x5x1xf32> to vector<8x5x32xf32>
    %77 = arith.mulf %60, %76 : vector<8x5x32xf32>
    %c0_28 = arith.constant 0 : index
    %c0_29 = arith.constant 0 : index
    %c0_30 = arith.constant 0 : index
    %78 = vector.load %arg7[%c0_28, %c0_29, %c0_30] : memref<8x5x32xf32, #tpu.memory_space<vmem>>, vector<8x5x32xf32>
    tpu.vector_store %arg7[%c0_28, %c0_29, %c0_30], %77 {strides = array<i32>} : memref<8x5x32xf32, #tpu.memory_space<vmem>>, vector<8x5x32xf32>,
    return
  }
  func.func @transform_0(%arg0: i32) -> (i32, i32, i32) {
    %c0_i32 = arith.constant 0 : i32
    %c0_i32_0 = arith.constant 0 : i32
    %c0_i32_1 = arith.constant 0 : i32
    return %arg0, %c0_i32, %c0_i32_0 : i32, i32, i32
  }
  func.func @transform_1(%arg0: i32) -> (i32, i32) {
    %c0_i32 = arith.constant 0 : i32
    %c0_i32_0 = arith.constant 0 : i32
    %c0_i32_1 = arith.constant 0 : i32
    return %c0_i32, %c0_i32_0 : i32, i32
  }
  func.func @transform_2(%arg0: i32) -> (i32, i32) {
    %c0_i32 = arith.constant 0 : i32
    %c0_i32_0 = arith.constant 0 : i32
    %c0_i32_1 = arith.constant 0 : i32
    return %c0_i32, %c0_i32_0 : i32, i32
  }
  func.func @transform_3(%arg0: i32) -> (i32, i32) {
    %c0_i32 = arith.constant 0 : i32
    %c0_i32_0 = arith.constant 0 : i32
    %c0_i32_1 = arith.constant 0 : i32
    return %c0_i32, %c0_i32_0 : i32, i32
  }
  func.func @transform_4(%arg0: i32) -> (i32, i32) {
    %c0_i32 = arith.constant 0 : i32
    %c0_i32_0 = arith.constant 0 : i32
    %c0_i32_1 = arith.constant 0 : i32
    return %c0_i32, %c0_i32_0 : i32, i32
  }
  func.func @transform_5(%arg0: i32) -> (i32, i32, i32) {
    %c0_i32 = arith.constant 0 : i32
    %c0_i32_0 = arith.constant 0 : i32
    %c0_i32_1 = arith.constant 0 : i32
    return %arg0, %c0_i32, %c0_i32_0 : i32, i32, i32
  }
  func.func @transform_6(%arg0: i32) -> (i32, i32, i32) {
    %c0_i32 = arith.constant 0 : i32
    %c0_i32_0 = arith.constant 0 : i32
    %c0_i32_1 = arith.constant 0 : i32
    return %arg0, %c0_i32, %c0_i32_0 : i32, i32, i32
  }
}

</mosaic_0001>

<llo_original>
// kernel: multivector_encoder.1
$region0: #{multivector_encoder.1}
  #allocation0 [shape = 'u32[]', space=smem, size = 0x4, offset = 0x4, fixed_abs, tag = 'smem constant byte address 0x4 - core index']
  #allocation1 [shape = 'u32[144,128]{1,0:T(1,128)}', space=vmem, size = 0x12000, scoped, tag = 'internal scratch']
  %s0 = inlined_call_operand.vmem [shape: bf16[16,16,192], index: 0, kind: input, shape index: {}]
  %s1 = inlined_call_operand.vmem [shape: bf16[192,32], index: 1, kind: input, shape index: {}]
  %s2 = inlined_call_operand.vmem [shape: f32[1,32], index: 2, kind: input, shape index: {}]
  %s3 = inlined_call_operand.vmem [shape: f32[5,32], index: 3, kind: input, shape index: {}]
  %s4 = inlined_call_operand.vmem [shape: f32[5,32], index: 4, kind: input, shape index: {}]
  %s5 = inlined_call_operand.vmem [shape: f32[16,5,32], index: 5, kind: output, shape index: {0}]
  %s6 = inlined_call_operand.vmem [shape: f32[16,5,32], index: 6, kind: output, shape index: {1}]
  %7 = xla_tuple %s5, %s6
  %s8 = sld [smem:[#allocation0]]
  $region61: #{multivector_encoder.1} parent=0
    _
  %s10 = ssub.s32 1, %s8
  %s11 = scalar_select 0, %s10, %s8
  loop: start=0, step=1, limit=4
  $region2: #{multivector_encoder.1} parent=0 // loop_pre_header
    _
  $region3: #{multivector_encoder.1} parent=0 // loop_header
    %s13 = sphi 0, %s17
    %p14 = scmp.ge.s32.totalorder %s13, 4
    %s23 = sphi 0, %s25
    %s26 = sphi 0, %s23
    %s27 = sphi 0, %s26
    %s43 = sphi 0, %s27
    %s47 = sphi 0, %s47
    %s49 = sphi 0, %s47
    %s50 = sphi 0, %s49
    %s64 = sphi 0, %s50
    %s68 = sphi 0, %s68
    %s70 = sphi 0, %s68
    %s71 = sphi 0, %s70
    %s85 = sphi 0, %s71
    %s89 = sphi 0, %s89
    %s91 = sphi 0, %s89
    %s92 = sphi 0, %s91
    %s106 = sphi 0, %s92
    %s110 = sphi 0, %s110
    %s112 = sphi 0, %s110
    %s113 = sphi 0, %s112
    %s127 = sphi 0, %s113
    %s133 = sphi 0, %s135
    %s136 = sphi 0, %s133
    %s137 = sphi 0, %s136
    %s153 = sphi 0, %s137
    %s159 = sphi 0, %s161
    %s162 = sphi 0, %s159
    %s163 = sphi 0, %s162
    %s179 = sphi 0, %s163
  $region4: #{multivector_encoder.1} parent=0 // loop_header_branch
    %16 = sbr.rel (%p14) target = $region8
  $region5: #{multivector_encoder.1} parent=0 // loop_body
    %s18 = ssub.s32 %s13, 1
    %s19 = ssub.s32 %s13, 2
    %s20 = sadd.s32 %s13, 1
    %s21 = ssub.s32 %s13, %s20
    %p22 = scmp.eq.s32.totalorder %s21, 0
    %s24 = sadd.s32 %s23, 1
    %s25 = scalar_select %p22, %s23, %s24
    %p28 = pneg %p22
    %p29 = scmp.eq.s32.totalorder %s13, 1
    %p30 = por %p28, %p29
    %p31 = scmp.ne.s32.totalorder %s23, %s26
    %p32 = scmp.eq.s32.totalorder %s13, 0
    %p33 = por %p31, %p32
    %p34 = scmp.ne.s32.totalorder %s23, %s26
    %p35 = scmp.eq.s32.totalorder %s18, 1
    %p36 = por %p34, %p35
    %p37 = scmp.ne.s32.totalorder %s26, %s27
    %p38 = scmp.eq.s32.totalorder %s18, 0
    %p39 = por %p37, %p38
    %p40 = scmp.ne.s32.totalorder %s26, %s27
    %p41 = scmp.eq.s32.totalorder %s19, 1
    %p42 = por %p40, %p41
    %p44 = scmp.ne.s32.totalorder %s27, %s43
    %p45 = scmp.eq.s32.totalorder %s19, 0
    %p46 = por %p44, %p45
    %s48 = sadd.s32 %s47, 1
    %p51 = scmp.eq.s32.totalorder %s13, 1
    %p52 = scmp.ne.s32.totalorder %s47, %s49
    %p53 = scmp.eq.s32.totalorder %s13, 0
    %p54 = por %p52, %p53
    %p55 = scmp.ne.s32.totalorder %s47, %s49
    %p56 = scmp.eq.s32.totalorder %s18, 1
    %p57 = por %p55, %p56
    %p58 = scmp.ne.s32.totalorder %s49, %s50
    %p59 = scmp.eq.s32.totalorder %s18, 0
    %p60 = por %p58, %p59
    %p61 = scmp.ne.s32.totalorder %s49, %s50
    %p62 = scmp.eq.s32.totalorder %s19, 1
    %p63 = por %p61, %p62
    %p65 = scmp.ne.s32.totalorder %s50, %s64
    %p66 = scmp.eq.s32.totalorder %s19, 0
    %p67 = por %p65, %p66
    %s69 = sadd.s32 %s68, 1
    %p72 = scmp.eq.s32.totalorder %s13, 1
    %p73 = scmp.ne.s32.totalorder %s68, %s70
    %p74 = scmp.eq.s32.totalorder %s13, 0
    %p75 = por %p73, %p74
    %p76 = scmp.ne.s32.totalorder %s68, %s70
    %p77 = scmp.eq.s32.totalorder %s18, 1
    %p78 = por %p76, %p77
    %p79 = scmp.ne.s32.totalorder %s70, %s71
    %p80 = scmp.eq.s32.totalorder %s18, 0
    %p81 = por %p79, %p80
    %p82 = scmp.ne.s32.totalorder %s70, %s71
    %p83 = scmp.eq.s32.totalorder %s19, 1
    %p84 = por %p82, %p83
    %p86 = scmp.ne.s32.totalorder %s71, %s85
    %p87 = scmp.eq.s32.totalorder %s19, 0
    %p88 = por %p86, %p87
    %s90 = sadd.s32 %s89, 1
    %p93 = scmp.eq.s32.totalorder %s13, 1
    %p94 = scmp.ne.s32.totalorder %s89, %s91
    %p95 = scmp.eq.s32.totalorder %s13, 0
    %p96 = por %p94, %p95
    %p97 = scmp.ne.s32.totalorder %s89, %s91
    %p98 = scmp.eq.s32.totalorder %s18, 1
    %p99 = por %p97, %p98
    %p100 = scmp.ne.s32.totalorder %s91, %s92
    %p101 = scmp.eq.s32.totalorder %s18, 0
    %p102 = por %p100, %p101
    %p103 = scmp.ne.s32.totalorder %s91, %s92
    %p104 = scmp.eq.s32.totalorder %s19, 1
    %p105 = por %p103, %p104
    %p107 = scmp.ne.s32.totalorder %s92, %s106
    %p108 = scmp.eq.s32.totalorder %s19, 0
    %p109 = por %p107, %p108
    %s111 = sadd.s32 %s110, 1
    %p114 = scmp.eq.s32.totalorder %s13, 1
    %p115 = scmp.ne.s32.totalorder %s110, %s112
    %p116 = scmp.eq.s32.totalorder %s13, 0
    %p117 = por %p115, %p116
    %p118 = scmp.ne.s32.totalorder %s110, %s112
    %p119 = scmp.eq.s32.totalorder %s18, 1
    %p120 = por %p118, %p119
    %p121 = scmp.ne.s32.totalorder %s112, %s113
    %p122 = scmp.eq.s32.totalorder %s18, 0
    %p123 = por %p121, %p122
    %p124 = scmp.ne.s32.totalorder %s112, %s113
    %p125 = scmp.eq.s32.totalorder %s19, 1
    %p126 = por %p124, %p125
    %p128 = scmp.ne.s32.totalorder %s113, %s127
    %p129 = scmp.eq.s32.totalorder %s19, 0
    %p130 = por %p128, %p129
    %s131 = ssub.s32 %s13, %s20
    %p132 = scmp.eq.s32.totalorder %s131, 0
    %s134 = sadd.s32 %s133, 1
    %s135 = scalar_select %p132, %s133, %s134
    %p138 = pneg %p132
    %p139 = scmp.eq.s32.totalorder %s13, 1
    %p140 = por %p138, %p139
    %p141 = scmp.ne.s32.totalorder %s133, %s136
    %p142 = scmp.eq.s32.totalorder %s13, 0
    %p143 = por %p141, %p142
    %p144 = scmp.ne.s32.totalorder %s133, %s136
    %p145 = scmp.eq.s32.totalorder %s18, 1
    %p146 = por %p144, %p145
    %p147 = scmp.ne.s32.totalorder %s136, %s137
    %p148 = scmp.eq.s32.totalorder %s18, 0
    %p149 = por %p147, %p148
    %p150 = scmp.ne.s32.totalorder %s136, %s137
    %p151 = scmp.eq.s32.totalorder %s19, 1
    %p152 = por %p150, %p151
    %p154 = scmp.ne.s32.totalorder %s137, %s153
    %p155 = scmp.eq.s32.totalorder %s19, 0
    %p156 = por %p154, %p155
    %s157 = ssub.s32 %s13, %s20
    %p158 = scmp.eq.s32.totalorder %s157, 0
    %s160 = sadd.s32 %s159, 1
    %s161 = scalar_select %p158, %s159, %s160
    %p164 = pneg %p158
    %p165 = scmp.eq.s32.totalorder %s13, 1
    %p166 = por %p164, %p165
    %p167 = scmp.ne.s32.totalorder %s159, %s162
    %p168 = scmp.eq.s32.totalorder %s13, 0
    %p169 = por %p167, %p168
    %p170 = scmp.ne.s32.totalorder %s159, %s162
    %p171 = scmp.eq.s32.totalorder %s18, 1
    %p172 = por %p170, %p171
    %p173 = scmp.ne.s32.totalorder %s162, %s163
    %p174 = scmp.eq.s32.totalorder %s18, 0
    %p175 = por %p173, %p174
    %p176 = scmp.ne.s32.totalorder %s162, %s163
    %p177 = scmp.eq.s32.totalorder %s19, 1
    %p178 = por %p176, %p177
    %p180 = scmp.ne.s32.totalorder %s163, %s179
    %p181 = scmp.eq.s32.totalorder %s19, 0
    %p182 = por %p180, %p181
    %p183 = scmp.le.s32.totalorder 1, %s13
    %p184 = scmp.lt.s32.totalorder %s13, 3
    %p185 = pnand %p183, %p184
    %p186 = pneg %p185
    // Predicated region
    $region9: #{multivector_encoder.1} parent=5 // pred_check
      _
    $region10: #{multivector_encoder.1} parent=5 // pred_check_branch
      %188 = sbr.rel (%p185) target = $region12
    $region11: #{multivector_encoder.1} parent=5 // pred_region
      %s189 = ssub.s32 %s13, 1
      // Predicated region
      $region13: #{multivector_encoder.1} parent=11 // pred_check
        %p190 = pneg %p60
      $region14: #{multivector_encoder.1} parent=11 // pred_check_branch
        %192 = sbr.rel (%p190) target = $region16
      $region15: #{multivector_encoder.1} parent=11 // pred_region
        _
      $region16: #{multivector_encoder.1} parent=11 // pred_fallthru
        _
      // Predicated region
      $region17: #{multivector_encoder.1} parent=11 // pred_check
        %p193 = pneg %p81
      $region18: #{multivector_encoder.1} parent=11 // pred_check_branch
        %195 = sbr.rel (%p193) target = $region20
      $region19: #{multivector_encoder.1} parent=11 // pred_region
        _
      $region20: #{multivector_encoder.1} parent=11 // pred_fallthru
        _
      // Predicated region
      $region21: #{multivector_encoder.1} parent=11 // pred_check
        %p196 = pneg %p102
      $region22: #{multivector_encoder.1} parent=11 // pred_check_branch
        %198 = sbr.rel (%p196) target = $region24
      $region23: #{multivector_encoder.1} parent=11 // pred_region
        _
      $region24: #{multivector_encoder.1} parent=11 // pred_fallthru
        _
      // Predicated region
      $region25: #{multivector_encoder.1} parent=11 // pred_check
        %p199 = pneg %p123
      $region26: #{multivector_encoder.1} parent=11 // pred_check_branch
        %201 = sbr.rel (%p199) target = $region28
      $region27: #{multivector_encoder.1} parent=11 // pred_region
        _
      $region28: #{multivector_encoder.1} parent=11 // pred_fallthru
        _
    $region12: #{multivector_encoder.1} parent=5 // pred_fallthru
      _
    %p202 = scmp.lt.s32.totalorder %s13, 2
    // Predicated region
    $region29: #{multivector_encoder.1} parent=5 // pred_check
      %p203 = pneg %p202
    $region30: #{multivector_encoder.1} parent=5 // pred_check_branch
      %205 = sbr.rel (%p203) target = $region32
    $region31: #{multivector_encoder.1} parent=5 // pred_region
      // Predicated region
      $region33: #{multivector_encoder.1} parent=31 // pred_check
        %p206 = pneg %p33
      $region34: #{multivector_encoder.1} parent=31 // pred_check_branch
        %208 = sbr.rel (%p206) target = $region36
      $region35: #{multivector_encoder.1} parent=31 // pred_region
        %s209 = smul.u32 8, %s13
        %p210 = scmp.lt.s32.totalorder %s209, 15
        %s211 = scalar_select %p210, %s209, 15
        %s212 = smul.addr %s211, 4
        %s213 = smul.addr %s212, 4
        %s214 = scalar_lea.vmem %s0, %s213
        %s215 = smul.u32 8, %s13
      $region36: #{multivector_encoder.1} parent=31 // pred_fallthru
        _
    $region32: #{multivector_encoder.1} parent=5 // pred_fallthru
      _
    %p216 = scmp.le.s32.totalorder 1, %s13
    %p217 = scmp.lt.s32.totalorder %s13, 3
    %p218 = pnand %p216, %p217
    %p219 = pneg %p218
    // Predicated region
    $region37: #{multivector_encoder.1} parent=5 // pred_check
      _
    $region38: #{multivector_encoder.1} parent=5 // pred_check_branch
      %221 = sbr.rel (%p218) target = $region40
    $region39: #{multivector_encoder.1} parent=5 // pred_region
      %s222 = ssub.s32 %s13, 1
      %s223 = smul.u32 8, %s18
      %p224 = scmp.lt.s32.totalorder %s223, 15
      %s225 = scalar_select %p224, %s223, 15
      %s226 = smul.addr %s225, 4
      %s227 = smul.addr %s226, 4
      %s228 = scalar_lea.vmem %s0, %s227
      %p229 = pneg %p39
      %p230 = pneg %p36
      %p231 = pneg %p60
      %p232 = pneg %p57
      %p233 = pneg %p81
      %p234 = pneg %p78
      %p235 = pneg %p102
      %p236 = pneg %p99
      %p237 = pneg %p123
      %p238 = pneg %p120
      %p239 = pneg %p149
      %p240 = pneg %p146
      %s241 = smul.u32 8, %s18
      %p242 = scmp.lt.s32.totalorder %s241, 15
      %s243 = scalar_select %p242, %s241, 15
      %s244 = smul.addr %s243, 8
      %s245 = scalar_lea.vmem %s5, %s244
      %p246 = pneg %p175
      %p247 = pneg %p172
      %s248 = smul.u32 8, %s18
      %p249 = scmp.lt.s32.totalorder %s248, 15
      %s250 = scalar_select %p249, %s248, 15
      %s251 = smul.addr %s250, 8
      %s252 = scalar_lea.vmem %s6, %s251
      %s253 = smul.u32 8, %s18
      %p254 = scmp.lt.s32.totalorder %s253, 15
      %s255 = scalar_select %p254, %s253, 15
      %s256 = smul.addr %s255, 4
      %s257 = smul.addr %s256, 4
      %s258 = scalar_lea.vmem %s0, %s257
      %s259 = smul.u32 8, %s18
      %s260 = smul.u32 8, %s18
      %p261 = scmp.lt.s32.totalorder %s260, 15
      %s262 = scalar_select %p261, %s260, 15
      %s263 = smul.addr %s262, 8
      %s264 = scalar_lea.vmem %s5, %s263
      %s265 = smul.u32 8, %s18
      %s266 = smul.u32 8, %s18
      %p267 = scmp.lt.s32.totalorder %s266, 15
      %s268 = scalar_select %p267, %s266, 15
      %s269 = smul.addr %s268, 8
      %s270 = scalar_lea.vmem %s6, %s269
      %s271 = smul.u32 8, %s18
      %v273 = vld [vmem:[%s258] sm:$0xff]
      %v274 = vld [vmem:[%s258 + $0x8] sm:$0xff]
      %v275 = vld [vmem:[%s258 + $0x10] sm:$0xff]
      %v276 = vld [vmem:[%s258 + $0x18] sm:$0xff]
      %v277 = vld [vmem:[%s258 + $0x20] sm:$0xff]
      %v278 = vld [vmem:[%s258 + $0x28] sm:$0xff]
      %v279 = vld [vmem:[%s258 + $0x30] sm:$0xff]
      %v280 = vld [vmem:[%s258 + $0x38] sm:$0xff]
      %v281 = vld [vmem:[%s258 + $0x40] sm:$0xff]
      %v282 = vld [vmem:[%s258 + $0x48] sm:$0xff]
      %v283 = vld [vmem:[%s258 + $0x50] sm:$0xff]
      %v284 = vld [vmem:[%s258 + $0x58] sm:$0xff]
      %v285 = vld [vmem:[%s258 + $0x60] sm:$0xff]
      %v286 = vld [vmem:[%s258 + $0x68] sm:$0xff]
      %v287 = vld [vmem:[%s258 + $0x70] sm:$0xff]
      %v288 = vld [vmem:[%s258 + $0x78] sm:$0xff]
      %v289 = vld [vmem:[%s1] sm:$0xf]
      %v290 = vld [vmem:[%s1 + $0x4] sm:$0xf]
      %v291 = vld [vmem:[%s1 + $0x8] sm:$0xf]
      %v292 = vld [vmem:[%s1 + $0xc] sm:$0xf]
      %v293 = vld [vmem:[%s1 + $0x10] sm:$0xf]
      %v294 = vld [vmem:[%s1 + $0x14] sm:$0xf]
      %v295 = vld [vmem:[%s1 + $0x18] sm:$0xf]
      %v296 = vld [vmem:[%s1 + $0x1c] sm:$0xf]
      %v297 = vld [vmem:[%s1 + $0x20] sm:$0xf]
      %v298 = vld [vmem:[%s1 + $0x24] sm:$0xf]
      %v299 = vld [vmem:[%s1 + $0x28] sm:$0xf]
      %v300 = vld [vmem:[%s1 + $0x2c] sm:$0xf]
      %v301 = vld [vmem:[%s1 + $0x30] sm:$0xf]
      %v302 = vld [vmem:[%s1 + $0x34] sm:$0xf]
      %v303 = vld [vmem:[%s1 + $0x38] sm:$0xf]
      %v304 = vld [vmem:[%s1 + $0x3c] sm:$0xf]
      %v305 = vld [vmem:[%s1 + $0x40] sm:$0xf]
      %v306 = vld [vmem:[%s1 + $0x44] sm:$0xf]
      %v307 = vld [vmem:[%s1 + $0x48] sm:$0xf]
      %v308 = vld [vmem:[%s1 + $0x4c] sm:$0xf]
      %v309 = vld [vmem:[%s1 + $0x50] sm:$0xf]
      %v310 = vld [vmem:[%s1 + $0x54] sm:$0xf]
      %v311 = vld [vmem:[%s1 + $0x58] sm:$0xf]
      %v312 = vld [vmem:[%s1 + $0x5c] sm:$0xf]
      %v313 = vld [vmem:[%s2] sm:$0x1]
      %v315 = vlaneseq
      %v316 = vshrl.u32 %v315, 7
      %v317 = vsub.s32 0, %v316
      %v318 = vrot.slane %v313, %v317
      %v336 = vunpack.c.l.b16 %v273
      %v337 = vunpack.c.h.b16 %v273
      %v338 = vunpack.c.l.b16 %v274
      %v339 = vunpack.c.h.b16 %v274
      %v340 = vunpack.c.l.b16 %v275
      %v341 = vunpack.c.h.b16 %v275
      %v342 = vunpack.c.l.b16 %v276
      %v343 = vunpack.c.h.b16 %v276
      %v344 = vunpack.c.l.b16 %v277
      %v345 = vunpack.c.h.b16 %v277
      %v346 = vunpack.c.l.b16 %v278
      %v347 = vunpack.c.h.b16 %v278
      %v348 = vunpack.c.l.b16 %v279
      %v349 = vunpack.c.h.b16 %v279
      %v350 = vunpack.c.l.b16 %v280
      %v351 = vunpack.c.h.b16 %v280
      %v352 = vunpack.c.l.b16 %v281
      %v353 = vunpack.c.h.b16 %v281
      %v354 = vunpack.c.l.b16 %v282
      %v355 = vunpack.c.h.b16 %v282
      %v356 = vunpack.c.l.b16 %v283
      %v357 = vunpack.c.h.b16 %v283
      %v358 = vunpack.c.l.b16 %v284
      %v359 = vunpack.c.h.b16 %v284
      %v360 = vunpack.c.l.b16 %v285
      %v361 = vunpack.c.h.b16 %v285
      %v362 = vunpack.c.l.b16 %v286
      %v363 = vunpack.c.h.b16 %v286
      %v364 = vunpack.c.l.b16 %v287
      %v365 = vunpack.c.h.b16 %v287
      %v366 = vunpack.c.l.b16 %v288
      %v367 = vunpack.c.h.b16 %v288
      %v368 = vpack.c.b16 %v338, %v336
      %v369 = vpack.c.b16 %v339, %v337
      %v370 = vpack.c.b16 %v342, %v340
      %v371 = vpack.c.b16 %v343, %v341
      %v372 = vpack.c.b16 %v346, %v344
      %v373 = vpack.c.b16 %v347, %v345
      %v374 = vpack.c.b16 %v350, %v348
      %v375 = vpack.c.b16 %v351, %v349
      %v376 = vpack.c.b16 %v354, %v352
      %v377 = vpack.c.b16 %v355, %v353
      %v378 = vpack.c.b16 %v358, %v356
      %v379 = vpack.c.b16 %v359, %v357
      %v380 = vpack.c.b16 %v362, %v360
      %v381 = vpack.c.b16 %v363, %v361
      %v382 = vpack.c.b16 %v366, %v364
      %v383 = vpack.c.b16 %v367, %v365
      %v416 = vunpack.c.l.b16 %v289
      %v417 = vunpack.c.l.b16 %v290
      %v418 = vunpack.c.l.b16 %v291
      %v419 = vunpack.c.l.b16 %v292
      %v420 = vunpack.c.l.b16 %v293
      %v421 = vunpack.c.l.b16 %v294
      %v422 = vunpack.c.l.b16 %v295
      %v423 = vunpack.c.l.b16 %v296
      %v424 = vunpack.c.l.b16 %v297
      %v425 = vunpack.c.l.b16 %v298
      %v426 = vunpack.c.l.b16 %v299
      %v427 = vunpack.c.l.b16 %v300
      %v428 = vunpack.c.l.b16 %v301
      %v429 = vunpack.c.l.b16 %v302
      %v430 = vunpack.c.l.b16 %v303
      %v431 = vunpack.c.l.b16 %v304
      %v432 = vunpack.c.l.b16 %v305
      %v433 = vunpack.c.l.b16 %v306
      %v434 = vunpack.c.l.b16 %v307
      %v435 = vunpack.c.l.b16 %v308
      %v436 = vunpack.c.l.b16 %v309
      %v437 = vunpack.c.l.b16 %v310
      %v438 = vunpack.c.l.b16 %v311
      %v439 = vunpack.c.l.b16 %v312
      %v440 = vpack.c.b16 %v417, %v416
      %v441 = vpack.c.b16 %v419, %v418
      %v442 = vpack.c.b16 %v421, %v420
      %v443 = vpack.c.b16 %v423, %v422
      %v444 = vpack.c.b16 %v425, %v424
      %v445 = vpack.c.b16 %v427, %v426
      %v446 = vpack.c.b16 %v429, %v428
      %v447 = vpack.c.b16 %v431, %v430
      %v448 = vpack.c.b16 %v433, %v432
      %v449 = vpack.c.b16 %v435, %v434
      %v450 = vpack.c.b16 %v437, %v436
      %v451 = vpack.c.b16 %v439, %v438
      %vm464 = vcmask 523264
      %v466 = vsel %vm464, %v369, 0
      %v469 = vsel %vm464, %v371, 0
      %v472 = vsel %vm464, %v373, 0
      %v475 = vsel %vm464, %v375, 0
      %v478 = vsel %vm464, %v377, 0
      %v481 = vsel %vm464, %v379, 0
      %v484 = vsel %vm464, %v381, 0
      %v487 = vsel %vm464, %v383, 0
      %489 = vmatprep.subr.bf16.mxu0 0
      %490 = vmatpush1.bf16.msra.mxu0 %v440
      %491 = vmatprep.subr.bf16.mxu0 0
      %492 = vmatpush1.bf16.msra.mxu0 %v441
      %493 = vmatprep.subr.bf16.mxu0 0
      %494 = vmatpush1.bf16.msra.mxu0 %v442
      %495 = vmatprep.subr.bf16.mxu0 0
      %496 = vmatpush1.bf16.msra.mxu0 %v443
      %497 = vmatprep.subr.bf16.mxu0 0
      %498 = vmatpush1.bf16.msra.mxu0 %v444
      %499 = vmatprep.subr.bf16.mxu0 0
      %500 = vmatpush1.bf16.msra.mxu0 %v445
      %501 = vmatprep.subr.bf16.mxu0 0
      %502 = vmatpush1.bf16.msra.mxu0 %v446
      %503 = vmatprep.subr.bf16.mxu0 0
      %504 = vmatpush1.bf16.msra.mxu0 %v447
      %505 = vmatprep.subr.bf16.mxu0 0
      %506 = vmatpush1.bf16.msra.mxu0 %v448
      %507 = vmatprep.subr.bf16.mxu0 0
      %508 = vmatpush1.bf16.msra.mxu0 %v449
      %509 = vmatprep.subr.bf16.mxu0 0
      %510 = vmatpush1.bf16.msra.mxu0 %v450
      %511 = vmatprep.subr.bf16.mxu0 0
      %512 = vmatpush1.bf16.msra.mxu0 %v451
      %513 = vmatprep.subr.bf16.mxu0 0
      %514 = vmatpush1.bf16.msra.mxu0 0
      %515 = vmatprep.subr.bf16.mxu0 0
      %516 = vmatpush1.bf16.msra.mxu0 0
      %517 = vmatprep.subr.bf16.mxu0 0
      %518 = vmatpush1.bf16.msra.mxu0 0
      %519 = vmatprep.subr.bf16.mxu0 0
      %520 = vmatpush1.bf16.msra.mxu0 0
      %521 = vmatprep.mubr.bf16.mxu0 %v466
      %522 = vmatmul.mubr.bf16.gmra.mrb[0].mxu0 %v368
      %v523 = vpop.f32.mrb[0].mxu0
      %v524 = vadd.f32 %v318, %v523
      %v525 = vpop.f32.mrb[0].mxu0
      %v526 = vpop.f32.mrb[0].mxu0
      %v527 = vadd.f32 %v318, %v526
      %v528 = vpop.f32.mrb[0].mxu0
      %529 = vmatprep.mubr.bf16.mxu0 %v469
      %530 = vmatmul.mubr.bf16.gmra.mrb[0].mxu0 %v370
      %v531 = vpop.f32.mrb[0].mxu0
      %v532 = vadd.f32 %v318, %v531
      %v533 = vpop.f32.mrb[0].mxu0
      %v534 = vpop.f32.mrb[0].mxu0
      %v535 = vadd.f32 %v318, %v534
      %v536 = vpop.f32.mrb[0].mxu0
      %537 = vmatprep.mubr.bf16.mxu0 %v472
      %538 = vmatmul.mubr.bf16.gmra.mrb[0].mxu0 %v372
      %v539 = vpop.f32.mrb[0].mxu0
      %v540 = vadd.f32 %v318, %v539
      %v541 = vpop.f32.mrb[0].mxu0
      %v542 = vpop.f32.mrb[0].mxu0
      %v543 = vadd.f32 %v318, %v542
      %v544 = vpop.f32.mrb[0].mxu0
      %545 = vmatprep.mubr.bf16.mxu0 %v475
      %546 = vmatmul.mubr.bf16.gmra.mrb[0].mxu0 %v374
      %v547 = vpop.f32.mrb[0].mxu0
      %v548 = vadd.f32 %v318, %v547
      %v549 = vpop.f32.mrb[0].mxu0
      %v550 = vpop.f32.mrb[0].mxu0
      %v551 = vadd.f32 %v318, %v550
      %v552 = vpop.f32.mrb[0].mxu0
      %553 = vmatprep.mubr.bf16.mxu0 %v478
      %554 = vmatmul.mubr.bf16.gmra.mrb[0].mxu0 %v376
      %v555 = vpop.f32.mrb[0].mxu0
      %v556 = vadd.f32 %v318, %v555
      %v557 = vpop.f32.mrb[0].mxu0
      %v558 = vpop.f32.mrb[0].mxu0
      %v559 = vadd.f32 %v318, %v558
      %v560 = vpop.f32.mrb[0].mxu0
      %561 = vmatprep.mubr.bf16.mxu0 %v481
      %562 = vmatmul.mubr.bf16.gmra.mrb[0].mxu0 %v378
      %v563 = vpop.f32.mrb[0].mxu0
      %v564 = vadd.f32 %v318, %v563
      %v565 = vpop.f32.mrb[0].mxu0
      %v566 = vpop.f32.mrb[0].mxu0
      %v567 = vadd.f32 %v318, %v566
      %v568 = vpop.f32.mrb[0].mxu0
      %569 = vmatprep.mubr.bf16.mxu0 %v484
      %570 = vmatmul.mubr.bf16.gmra.mrb[0].mxu0 %v380
      %v571 = vpop.f32.mrb[0].mxu0
      %v572 = vadd.f32 %v318, %v571
      %v573 = vpop.f32.mrb[0].mxu0
      %v574 = vpop.f32.mrb[0].mxu0
      %v575 = vadd.f32 %v318, %v574
      %v576 = vpop.f32.mrb[0].mxu0
      %577 = vmatprep.mubr.bf16.mxu0 %v487
      %578 = vmatmul.mubr.bf16.gmra.mrb[0].mxu0 %v382
      %v579 = vpop.f32.mrb[0].mxu0
      %v580 = vadd.f32 %v318, %v579
      %v581 = vpop.f32.mrb[0].mxu0
      %v582 = vpop.f32.mrb[0].mxu0
      %v583 = vadd.f32 %v318, %v582
      %v584 = vpop.f32.mrb[0].mxu0
      %585 = vdwg.mxu0
      %vm586 = vcmask 261120
      %v587 = vsel %vm586, %v524, 0.0
      %v588 = vsel %vm586, %v527, 0.0
      %v589 = vadd.f32 %v587, %v588
      %v590 = vrot.slane %v589, 4
      %v591 = vadd.f32 %v589, %v590
      %v592 = vrot.slane %v591, 2
      %v593 = vadd.f32 %v591, %v592
      %v594 = vrot.slane %v593, 1
      %v595 = vadd.f32 %v593, %v594
      %v596 = vsel %vm586, %v532, 0.0
      %v597 = vsel %vm586, %v535, 0.0
      %v598 = vadd.f32 %v596, %v597
      %v599 = vrot.slane %v598, 4
      %v600 = vadd.f32 %v598, %v599
      %v601 = vrot.slane %v600, 2
      %v602 = vadd.f32 %v600, %v601
      %v603 = vrot.slane %v602, 1
      %v604 = vadd.f32 %v602, %v603
      %v605 = vsel %vm586, %v540, 0.0
      %v606 = vsel %vm586, %v543, 0.0
      %v607 = vadd.f32 %v605, %v606
      %v608 = vrot.slane %v607, 4
      %v609 = vadd.f32 %v607, %v608
      %v610 = vrot.slane %v609, 2
      %v611 = vadd.f32 %v609, %v610
      %v612 = vrot.slane %v611, 1
      %v613 = vadd.f32 %v611, %v612
      %v614 = vsel %vm586, %v548, 0.0
      %v615 = vsel %vm586, %v551, 0.0
      %v616 = vadd.f32 %v614, %v615
      %v617 = vrot.slane %v616, 4
      %v618 = vadd.f32 %v616, %v617
      %v619 = vrot.slane %v618, 2
      %v620 = vadd.f32 %v618, %v619
      %v621 = vrot.slane %v620, 1
      %v622 = vadd.f32 %v620, %v621
      %v623 = vsel %vm586, %v556, 0.0
      %v624 = vsel %vm586, %v559, 0.0
      %v625 = vadd.f32 %v623, %v624
      %v626 = vrot.slane %v625, 4
      %v627 = vadd.f32 %v625, %v626
      %v628 = vrot.slane %v627, 2
      %v629 = vadd.f32 %v627, %v628
      %v630 = vrot.slane %v629, 1
      %v631 = vadd.f32 %v629, %v630
      %v632 = vsel %vm586, %v564, 0.0
      %v633 = vsel %vm586, %v567, 0.0
      %v634 = vadd.f32 %v632, %v633
      %v635 = vrot.slane %v634, 4
      %v636 = vadd.f32 %v634, %v635
      %v637 = vrot.slane %v636, 2
      %v638 = vadd.f32 %v636, %v637
      %v639 = vrot.slane %v638, 1
      %v640 = vadd.f32 %v638, %v639
      %v641 = vsel %vm586, %v572, 0.0
      %v642 = vsel %vm586, %v575, 0.0
      %v643 = vadd.f32 %v641, %v642
      %v644 = vrot.slane %v643, 4
      %v645 = vadd.f32 %v643, %v644
      %v646 = vrot.slane %v645, 2
      %v647 = vadd.f32 %v645, %v646
      %v648 = vrot.slane %v647, 1
      %v649 = vadd.f32 %v647, %v648
      %v650 = vsel %vm586, %v580, 0.0
      %v651 = vsel %vm586, %v583, 0.0
      %v652 = vadd.f32 %v650, %v651
      %v653 = vrot.slane %v652, 4
      %v654 = vadd.f32 %v652, %v653
      %v655 = vrot.slane %v654, 2
      %v656 = vadd.f32 %v654, %v655
      %v657 = vrot.slane %v656, 1
      %v658 = vadd.f32 %v656, %v657
      %v659 = vrcp.pop 16.0
      %v660 = vmul.f32 %v595, %v659
      %v661 = vmul.f32 %v604, %v659
      %v662 = vmul.f32 %v613, %v659
      %v663 = vmul.f32 %v622, %v659
      %v664 = vmul.f32 %v631, %v659
      %v665 = vmul.f32 %v640, %v659
      %v666 = vmul.f32 %v649, %v659
      %v667 = vmul.f32 %v658, %v659
      %v668 = vld [vmem:[%s3] sm:$0x1f]
      %v669 = vld [vmem:[%s4] sm:$0x1f]
      %v670 = vmul.f32 %v669, %v660
      %v671 = vmul.f32 %v669, %v661
      %v672 = vmul.f32 %v669, %v662
      %v673 = vmul.f32 %v669, %v663
      %v674 = vmul.f32 %v669, %v664
      %v675 = vmul.f32 %v669, %v665
      %v676 = vmul.f32 %v669, %v666
      %v677 = vmul.f32 %v669, %v667
      %v678 = vadd.f32 %v668, %v670
      %v679 = vadd.f32 %v668, %v671
      %v680 = vadd.f32 %v668, %v672
      %v681 = vadd.f32 %v668, %v673
      %v682 = vadd.f32 %v668, %v674
      %v683 = vadd.f32 %v668, %v675
      %v684 = vadd.f32 %v668, %v676
      %v685 = vadd.f32 %v668, %v677
      %v687 = vsel %vm586, %v678, 0
      %v690 = vsel %vm586, %v524, 0
      %v693 = vsel %vm586, %v527, 0
      %695 = vmatprep.subr.mxu0 0.0
      %696 = vmatpush1.xpose.msra.mxu0 %v690
      %697 = vmatprep.subr.mxu0 0.0
      %698 = vmatpush1.xpose.msra.mxu0 %v693
      %699 = vmatprep.subr.mxu0 0.0
      %700 = vmatpush1.xpose.msra.mxu0 0.0
      %701 = vmatprep.subr.mxu0 0.0
      %702 = vmatpush1.xpose.msra.mxu0 0.0
      %703 = vmatprep.subr.mxu0 0.0
      %704 = vmatpush1.xpose.msra.mxu0 0.0
      %705 = vmatprep.subr.mxu0 0.0
      %706 = vmatpush1.xpose.msra.mxu0 0.0
      %707 = vmatprep.subr.mxu0 0.0
      %708 = vmatpush1.xpose.msra.mxu0 0.0
      %709 = vmatprep.subr.mxu0 0.0
      %710 = vmatpush1.xpose.msra.mxu0 0.0
      %711 = vmatprep.subr.mxu0 0.0
      %712 = vmatpush1.xpose.msra.mxu0 0.0
      %713 = vmatprep.subr.mxu0 0.0
      %714 = vmatpush1.xpose.msra.mxu0 0.0
      %715 = vmatprep.subr.mxu0 0.0
      %716 = vmatpush1.xpose.msra.mxu0 0.0
      %717 = vmatprep.subr.mxu0 0.0
      %718 = vmatpush1.xpose.msra.mxu0 0.0
      %719 = vmatprep.subr.mxu0 0.0
      %720 = vmatpush1.xpose.msra.mxu0 0.0
      %721 = vmatprep.subr.mxu0 0.0
      %722 = vmatpush1.xpose.msra.mxu0 0.0
      %723 = vmatprep.subr.mxu0 0.0
      %724 = vmatpush1.xpose.msra.mxu0 0.0
      %725 = vmatprep.subr.mxu0 0.0
      %726 = vmatpush1.xpose.msra.mxu0 0.0
      %727 = vmatprep.subr.mxu0 0.0
      %728 = vmatpush1.xpose.msra.mxu0 0.0
      %729 = vmatprep.subr.mxu0 0.0
      %730 = vmatpush1.xpose.msra.mxu0 0.0
      %731 = vmatprep.subr.mxu0 0.0
      %732 = vmatpush1.xpose.msra.mxu0 0.0
      %733 = vmatprep.subr.mxu0 0.0
      %734 = vmatpush1.xpose.msra.mxu0 0.0
      %735 = vmatprep.subr.mxu0 0.0
      %736 = vmatpush1.xpose.msra.mxu0 0.0
      %737 = vmatprep.subr.mxu0 0.0
      %738 = vmatpush1.xpose.msra.mxu0 0.0
      %739 = vmatprep.subr.mxu0 0.0
      %740 = vmatpush1.xpose.msra.mxu0 0.0
      %741 = vmatprep.subr.mxu0 0.0
      %742 = vmatpush1.xpose.msra.mxu0 0.0
      %743 = vmatprep.subr.mxu0 0.0
      %744 = vmatpush1.xpose.msra.mxu0 0.0
      %745 = vmatprep.subr.mxu0 0.0
      %746 = vmatpush1.xpose.msra.mxu0 0.0
      %747 = vmatprep.subr.mxu0 0.0
      %748 = vmatpush1.xpose.msra.mxu0 0.0
      %749 = vmatprep.subr.mxu0 0.0
      %750 = vmatpush1.xpose.msra.mxu0 0.0
      %751 = vmatprep.subr.mxu0 0.0
      %752 = vmatpush1.xpose.msra.mxu0 0.0
      %753 = vmatprep.subr.mxu0 0.0
      %754 = vmatpush1.xpose.msra.mxu0 0.0
      %755 = vmatprep.subr.mxu0 0.0
      %756 = vmatpush1.xpose.msra.mxu0 0.0
      %757 = vmatprep.subr.mxu0 0.0
      %758 = vmatpush1.xpose.msra.mxu0 0.0
      %759 = vmatprep.mubr.f32.mxu0 0.0
      %760 = vmatmul.mubr.f32.gmra.mrb[0].mxu0 %v687
      %v761 = vpop.f32.mrb[0].mxu0
      %v762 = vadd.f32 0.0, %v761
      %v763 = vpop.f32.mrb[0].mxu0
      %764 = vdwg.mxu0
      %v766 = vsel %vm586, %v679, 0
      %v769 = vsel %vm586, %v532, 0
      %v772 = vsel %vm586, %v535, 0
      %774 = vmatprep.subr.mxu0 0.0
      %775 = vmatpush1.xpose.msra.mxu0 %v769
      %776 = vmatprep.subr.mxu0 0.0
      %777 = vmatpush1.xpose.msra.mxu0 %v772
      %778 = vmatprep.subr.mxu0 0.0
      %779 = vmatpush1.xpose.msra.mxu0 0.0
      %780 = vmatprep.subr.mxu0 0.0
      %781 = vmatpush1.xpose.msra.mxu0 0.0
      %782 = vmatprep.subr.mxu0 0.0
      %783 = vmatpush1.xpose.msra.mxu0 0.0
      %784 = vmatprep.subr.mxu0 0.0
      %785 = vmatpush1.xpose.msra.mxu0 0.0
      %786 = vmatprep.subr.mxu0 0.0
      %787 = vmatpush1.xpose.msra.mxu0 0.0
      %788 = vmatprep.subr.mxu0 0.0
      %789 = vmatpush1.xpose.msra.mxu0 0.0
      %790 = vmatprep.subr.mxu0 0.0
      %791 = vmatpush1.xpose.msra.mxu0 0.0
      %792 = vmatprep.subr.mxu0 0.0
      %793 = vmatpush1.xpose.msra.mxu0 0.0
      %794 = vmatprep.subr.mxu0 0.0
      %795 = vmatpush1.xpose.msra.mxu0 0.0
      %796 = vmatprep.subr.mxu0 0.0
      %797 = vmatpush1.xpose.msra.mxu0 0.0
      %798 = vmatprep.subr.mxu0 0.0
      %799 = vmatpush1.xpose.msra.mxu0 0.0
      %800 = vmatprep.subr.mxu0 0.0
      %801 = vmatpush1.xpose.msra.mxu0 0.0
      %802 = vmatprep.subr.mxu0 0.0
      %803 = vmatpush1.xpose.msra.mxu0 0.0
      %804 = vmatprep.subr.mxu0 0.0
      %805 = vmatpush1.xpose.msra.mxu0 0.0
      %806 = vmatprep.subr.mxu0 0.0
      %807 = vmatpush1.xpose.msra.mxu0 0.0
      %808 = vmatprep.subr.mxu0 0.0
      %809 = vmatpush1.xpose.msra.mxu0 0.0
      %810 = vmatprep.subr.mxu0 0.0
      %811 = vmatpush1.xpose.msra.mxu0 0.0
      %812 = vmatprep.subr.mxu0 0.0
      %813 = vmatpush1.xpose.msra.mxu0 0.0
      %814 = vmatprep.subr.mxu0 0.0
      %815 = vmatpush1.xpose.msra.mxu0 0.0
      %816 = vmatprep.subr.mxu0 0.0
      %817 = vmatpush1.xpose.msra.mxu0 0.0
      %818 = vmatprep.subr.mxu0 0.0
      %819 = vmatpush1.xpose.msra.mxu0 0.0
      %820 = vmatprep.subr.mxu0 0.0
      %821 = vmatpush1.xpose.msra.mxu0 0.0
      %822 = vmatprep.subr.mxu0 0.0
      %823 = vmatpush1.xpose.msra.mxu0 0.0
      %824 = vmatprep.subr.mxu0 0.0
      %825 = vmatpush1.xpose.msra.mxu0 0.0
      %826 = vmatprep.subr.mxu0 0.0
      %827 = vmatpush1.xpose.msra.mxu0 0.0
      %828 = vmatprep.subr.mxu0 0.0
      %829 = vmatpush1.xpose.msra.mxu0 0.0
      %830 = vmatprep.subr.mxu0 0.0
      %831 = vmatpush1.xpose.msra.mxu0 0.0
      %832 = vmatprep.subr.mxu0 0.0
      %833 = vmatpush1.xpose.msra.mxu0 0.0
      %834 = vmatprep.subr.mxu0 0.0
      %835 = vmatpush1.xpose.msra.mxu0 0.0
      %836 = vmatprep.subr.mxu0 0.0
      %837 = vmatpush1.xpose.msra.mxu0 0.0
      %838 = vmatprep.mubr.f32.mxu0 0.0
      %839 = vmatmul.mubr.f32.gmra.mrb[0].mxu0 %v766
      %v840 = vpop.f32.mrb[0].mxu0
      %v841 = vadd.f32 0.0, %v840
      %v842 = vpop.f32.mrb[0].mxu0
      %843 = vdwg.mxu0
      %v845 = vsel %vm586, %v680, 0
      %v848 = vsel %vm586, %v540, 0
      %v851 = vsel %vm586, %v543, 0
      %853 = vmatprep.subr.mxu0 0.0
      %854 = vmatpush1.xpose.msra.mxu0 %v848
      %855 = vmatprep.subr.mxu0 0.0
      %856 = vmatpush1.xpose.msra.mxu0 %v851
      %857 = vmatprep.subr.mxu0 0.0
      %858 = vmatpush1.xpose.msra.mxu0 0.0
      %859 = vmatprep.subr.mxu0 0.0
      %860 = vmatpush1.xpose.msra.mxu0 0.0
      %861 = vmatprep.subr.mxu0 0.0
      %862 = vmatpush1.xpose.msra.mxu0 0.0
      %863 = vmatprep.subr.mxu0 0.0
      %864 = vmatpush1.xpose.msra.mxu0 0.0
      %865 = vmatprep.subr.mxu0 0.0
      %866 = vmatpush1.xpose.msra.mxu0 0.0
      %867 = vmatprep.subr.mxu0 0.0
      %868 = vmatpush1.xpose.msra.mxu0 0.0
      %869 = vmatprep.subr.mxu0 0.0
      %870 = vmatpush1.xpose.msra.mxu0 0.0
      %871 = vmatprep.subr.mxu0 0.0
      %872 = vmatpush1.xpose.msra.mxu0 0.0
      %873 = vmatprep.subr.mxu0 0.0
      %874 = vmatpush1.xpose.msra.mxu0 0.0
      %875 = vmatprep.subr.mxu0 0.0
      %876 = vmatpush1.xpose.msra.mxu0 0.0
      %877 = vmatprep.subr.mxu0 0.0
      %878 = vmatpush1.xpose.msra.mxu0 0.0
      %879 = vmatprep.subr.mxu0 0.0
      %880 = vmatpush1.xpose.msra.mxu0 0.0
      %881 = vmatprep.subr.mxu0 0.0
      %882 = vmatpush1.xpose.msra.mxu0 0.0
      %883 = vmatprep.subr.mxu0 0.0
      %884 = vmatpush1.xpose.msra.mxu0 0.0
      %885 = vmatprep.subr.mxu0 0.0
      %886 = vmatpush1.xpose.msra.mxu0 0.0
      %887 = vmatprep.subr.mxu0 0.0
      %888 = vmatpush1.xpose.msra.mxu0 0.0
      %889 = vmatprep.subr.mxu0 0.0
      %890 = vmatpush1.xpose.msra.mxu0 0.0
      %891 = vmatprep.subr.mxu0 0.0
      %892 = vmatpush1.xpose.msra.mxu0 0.0
      %893 = vmatprep.subr.mxu0 0.0
      %894 = vmatpush1.xpose.msra.mxu0 0.0
      %895 = vmatprep.subr.mxu0 0.0
      %896 = vmatpush1.xpose.msra.mxu0 0.0
      %897 = vmatprep.subr.mxu0 0.0
      %898 = vmatpush1.xpose.msra.mxu0 0.0
      %899 = vmatprep.subr.mxu0 0.0
      %900 = vmatpush1.xpose.msra.mxu0 0.0
      %901 = vmatprep.subr.mxu0 0.0
      %902 = vmatpush1.xpose.msra.mxu0 0.0
      %903 = vmatprep.subr.mxu0 0.0
      %904 = vmatpush1.xpose.msra.mxu0 0.0
      %905 = vmatprep.subr.mxu0 0.0
      %906 = vmatpush1.xpose.msra.mxu0 0.0
      %907 = vmatprep.subr.mxu0 0.0
      %908 = vmatpush1.xpose.msra.mxu0 0.0
      %909 = vmatprep.subr.mxu0 0.0
      %910 = vmatpush1.xpose.msra.mxu0 0.0
      %911 = vmatprep.subr.mxu0 0.0
      %912 = vmatpush1.xpose.msra.mxu0 0.0
      %913 = vmatprep.subr.mxu0 0.0
      %914 = vmatpush1.xpose.msra.mxu0 0.0
      %915 = vmatprep.subr.mxu0 0.0
      %916 = vmatpush1.xpose.msra.mxu0 0.0
      %917 = vmatprep.mubr.f32.mxu0 0.0
      %918 = vmatmul.mubr.f32.gmra.mrb[0].mxu0 %v845
      %v919 = vpop.f32.mrb[0].mxu0
      %v920 = vadd.f32 0.0, %v919
      %v921 = vpop.f32.mrb[0].mxu0
      %922 = vdwg.mxu0
      %v924 = vsel %vm586, %v681, 0
      %v927 = vsel %vm586, %v548, 0
      %v930 = vsel %vm586, %v551, 0
      %932 = vmatprep.subr.mxu0 0.0
      %933 = vmatpush1.xpose.msra.mxu0 %v927
      %934 = vmatprep.subr.mxu0 0.0
      %935 = vmatpush1.xpose.msra.mxu0 %v930
      %936 = vmatprep.subr.mxu0 0.0
      %937 = vmatpush1.xpose.msra.mxu0 0.0
      %938 = vmatprep.subr.mxu0 0.0
      %939 = vmatpush1.xpose.msra.mxu0 0.0
      %940 = vmatprep.subr.mxu0 0.0
      %941 = vmatpush1.xpose.msra.mxu0 0.0
      %942 = vmatprep.subr.mxu0 0.0
      %943 = vmatpush1.xpose.msra.mxu0 0.0
      %944 = vmatprep.subr.mxu0 0.0
      %945 = vmatpush1.xpose.msra.mxu0 0.0
      %946 = vmatprep.subr.mxu0 0.0
      %947 = vmatpush1.xpose.msra.mxu0 0.0
      %948 = vmatprep.subr.mxu0 0.0
      %949 = vmatpush1.xpose.msra.mxu0 0.0
      %950 = vmatprep.subr.mxu0 0.0
      %951 = vmatpush1.xpose.msra.mxu0 0.0
      %952 = vmatprep.subr.mxu0 0.0
      %953 = vmatpush1.xpose.msra.mxu0 0.0
      %954 = vmatprep.subr.mxu0 0.0
      %955 = vmatpush1.xpose.msra.mxu0 0.0
      %956 = vmatprep.subr.mxu0 0.0
      %957 = vmatpush1.xpose.msra.mxu0 0.0
      %958 = vmatprep.subr.mxu0 0.0
      %959 = vmatpush1.xpose.msra.mxu0 0.0
      %960 = vmatprep.subr.mxu0 0.0
      %961 = vmatpush1.xpose.msra.mxu0 0.0
      %962 = vmatprep.subr.mxu0 0.0
      %963 = vmatpush1.xpose.msra.mxu0 0.0
      %964 = vmatprep.subr.mxu0 0.0
      %965 = vmatpush1.xpose.msra.mxu0 0.0
      %966 = vmatprep.subr.mxu0 0.0
      %967 = vmatpush1.xpose.msra.mxu0 0.0
      %968 = vmatprep.subr.mxu0 0.0
      %969 = vmatpush1.xpose.msra.mxu0 0.0
      %970 = vmatprep.subr.mxu0 0.0
      %971 = vmatpush1.xpose.msra.mxu0 0.0
      %972 = vmatprep.subr.mxu0 0.0
      %973 = vmatpush1.xpose.msra.mxu0 0.0
      %974 = vmatprep.subr.mxu0 0.0
      %975 = vmatpush1.xpose.msra.mxu0 0.0
      %976 = vmatprep.subr.mxu0 0.0
      %977 = vmatpush1.xpose.msra.mxu0 0.0
      %978 = vmatprep.subr.mxu0 0.0
      %979 = vmatpush1.xpose.msra.mxu0 0.0
      %980 = vmatprep.subr.mxu0 0.0
      %981 = vmatpush1.xpose.msra.mxu0 0.0
      %982 = vmatprep.subr.mxu0 0.0
      %983 = vmatpush1.xpose.msra.mxu0 0.0
      %984 = vmatprep.subr.mxu0 0.0
      %985 = vmatpush1.xpose.msra.mxu0 0.0
      %986 = vmatprep.subr.mxu0 0.0
      %987 = vmatpush1.xpose.msra.mxu0 0.0
      %988 = vmatprep.subr.mxu0 0.0
      %989 = vmatpush1.xpose.msra.mxu0 0.0
      %990 = vmatprep.subr.mxu0 0.0
      %991 = vmatpush1.xpose.msra.mxu0 0.0
      %992 = vmatprep.subr.mxu0 0.0
      %993 = vmatpush1.xpose.msra.mxu0 0.0
      %994 = vmatprep.subr.mxu0 0.0
      %995 = vmatpush1.xpose.msra.mxu0 0.0
      %996 = vmatprep.mubr.f32.mxu0 0.0
      %997 = vmatmul.mubr.f32.gmra.mrb[0].mxu0 %v924
      %v998 = vpop.f32.mrb[0].mxu0
      %v999 = vadd.f32 0.0, %v998
      %v1000 = vpop.f32.mrb[0].mxu0
      %1001 = vdwg.mxu0
      %v1003 = vsel %vm586, %v682, 0
      %v1006 = vsel %vm586, %v556, 0
      %v1009 = vsel %vm586, %v559, 0
      %1011 = vmatprep.subr.mxu0 0.0
      %1012 = vmatpush1.xpose.msra.mxu0 %v1006
      %1013 = vmatprep.subr.mxu0 0.0
      %1014 = vmatpush1.xpose.msra.mxu0 %v1009
      %1015 = vmatprep.subr.mxu0 0.0
      %1016 = vmatpush1.xpose.msra.mxu0 0.0
      %1017 = vmatprep.subr.mxu0 0.0
      %1018 = vmatpush1.xpose.msra.mxu0 0.0
      %1019 = vmatprep.subr.mxu0 0.0
      %1020 = vmatpush1.xpose.msra.mxu0 0.0
      %1021 = vmatprep.subr.mxu0 0.0
      %1022 = vmatpush1.xpose.msra.mxu0 0.0
      %1023 = vmatprep.subr.mxu0 0.0
      %1024 = vmatpush1.xpose.msra.mxu0 0.0
      %1025 = vmatprep.subr.mxu0 0.0
      %1026 = vmatpush1.xpose.msra.mxu0 0.0
      %1027 = vmatprep.subr.mxu0 0.0
      %1028 = vmatpush1.xpose.msra.mxu0 0.0
      %1029 = vmatprep.subr.mxu0 0.0
      %1030 = vmatpush1.xpose.msra.mxu0 0.0
      %1031 = vmatprep.subr.mxu0 0.0
      %1032 = vmatpush1.xpose.msra.mxu0 0.0
      %1033 = vmatprep.subr.mxu0 0.0
      %1034 = vmatpush1.xpose.msra.mxu0 0.0
      %1035 = vmatprep.subr.mxu0 0.0
      %1036 = vmatpush1.xpose.msra.mxu0 0.0
      %1037 = vmatprep.subr.mxu0 0.0
      %1038 = vmatpush1.xpose.msra.mxu0 0.0
      %1039 = vmatprep.subr.mxu0 0.0
      %1040 = vmatpush1.xpose.msra.mxu0 0.0
      %1041 = vmatprep.subr.mxu0 0.0
      %1042 = vmatpush1.xpose.msra.mxu0 0.0
      %1043 = vmatprep.subr.mxu0 0.0
      %1044 = vmatpush1.xpose.msra.mxu0 0.0
      %1045 = vmatprep.subr.mxu0 0.0
      %1046 = vmatpush1.xpose.msra.mxu0 0.0
      %1047 = vmatprep.subr.mxu0 0.0
      %1048 = vmatpush1.xpose.msra.mxu0 0.0
      %1049 = vmatprep.subr.mxu0 0.0
      %1050 = vmatpush1.xpose.msra.mxu0 0.0
      %1051 = vmatprep.subr.mxu0 0.0
      %1052 = vmatpush1.xpose.msra.mxu0 0.0
      %1053 = vmatprep.subr.mxu0 0.0
      %1054 = vmatpush1.xpose.msra.mxu0 0.0
      %1055 = vmatprep.subr.mxu0 0.0
      %1056 = vmatpush1.xpose.msra.mxu0 0.0
      %1057 = vmatprep.subr.mxu0 0.0
      %1058 = vmatpush1.xpose.msra.mxu0 0.0
      %1059 = vmatprep.subr.mxu0 0.0
      %1060 = vmatpush1.xpose.msra.mxu0 0.0
      %1061 = vmatprep.subr.mxu0 0.0
      %1062 = vmatpush1.xpose.msra.mxu0 0.0
      %1063 = vmatprep.subr.mxu0 0.0
      %1064 = vmatpush1.xpose.msra.mxu0 0.0
      %1065 = vmatprep.subr.mxu0 0.0
      %1066 = vmatpush1.xpose.msra.mxu0 0.0
      %1067 = vmatprep.subr.mxu0 0.0
      %1068 = vmatpush1.xpose.msra.mxu0 0.0
      %1069 = vmatprep.subr.mxu0 0.0
      %1070 = vmatpush1.xpose.msra.mxu0 0.0
      %1071 = vmatprep.subr.mxu0 0.0
      %1072 = vmatpush1.xpose.msra.mxu0 0.0
      %1073 = vmatprep.subr.mxu0 0.0
      %1074 = vmatpush1.xpose.msra.mxu0 0.0
      %1075 = vmatprep.mubr.f32.mxu0 0.0
      %1076 = vmatmul.mubr.f32.gmra.mrb[0].mxu0 %v1003
      %v1077 = vpop.f32.mrb[0].mxu0
      %v1078 = vadd.f32 0.0, %v1077
      %v1079 = vpop.f32.mrb[0].mxu0
      %1080 = vdwg.mxu0
      %v1082 = vsel %vm586, %v683, 0
      %v1085 = vsel %vm586, %v564, 0
      %v1088 = vsel %vm586, %v567, 0
      %1090 = vmatprep.subr.mxu0 0.0
      %1091 = vmatpush1.xpose.msra.mxu0 %v1085
      %1092 = vmatprep.subr.mxu0 0.0
      %1093 = vmatpush1.xpose.msra.mxu0 %v1088
      %1094 = vmatprep.subr.mxu0 0.0
      %1095 = vmatpush1.xpose.msra.mxu0 0.0
      %1096 = vmatprep.subr.mxu0 0.0
      %1097 = vmatpush1.xpose.msra.mxu0 0.0
      %1098 = vmatprep.subr.mxu0 0.0
      %1099 = vmatpush1.xpose.msra.mxu0 0.0
      %1100 = vmatprep.subr.mxu0 0.0
      %1101 = vmatpush1.xpose.msra.mxu0 0.0
      %1102 = vmatprep.subr.mxu0 0.0
      %1103 = vmatpush1.xpose.msra.mxu0 0.0
      %1104 = vmatprep.subr.mxu0 0.0
      %1105 = vmatpush1.xpose.msra.mxu0 0.0
      %1106 = vmatprep.subr.mxu0 0.0
      %1107 = vmatpush1.xpose.msra.mxu0 0.0
      %1108 = vmatprep.subr.mxu0 0.0
      %1109 = vmatpush1.xpose.msra.mxu0 0.0
      %1110 = vmatprep.subr.mxu0 0.0
      %1111 = vmatpush1.xpose.msra.mxu0 0.0
      %1112 = vmatprep.subr.mxu0 0.0
      %1113 = vmatpush1.xpose.msra.mxu0 0.0
      %1114 = vmatprep.subr.mxu0 0.0
      %1115 = vmatpush1.xpose.msra.mxu0 0.0
      %1116 = vmatprep.subr.mxu0 0.0
      %1117 = vmatpush1.xpose.msra.mxu0 0.0
      %1118 = vmatprep.subr.mxu0 0.0
      %1119 = vmatpush1.xpose.msra.mxu0 0.0
      %1120 = vmatprep.subr.mxu0 0.0
      %1121 = vmatpush1.xpose.msra.mxu0 0.0
      %1122 = vmatprep.subr.mxu0 0.0
      %1123 = vmatpush1.xpose.msra.mxu0 0.0
      %1124 = vmatprep.subr.mxu0 0.0
      %1125 = vmatpush1.xpose.msra.mxu0 0.0
      %1126 = vmatprep.subr.mxu0 0.0
      %1127 = vmatpush1.xpose.msra.mxu0 0.0
      %1128 = vmatprep.subr.mxu0 0.0
      %1129 = vmatpush1.xpose.msra.mxu0 0.0
      %1130 = vmatprep.subr.mxu0 0.0
      %1131 = vmatpush1.xpose.msra.mxu0 0.0
      %1132 = vmatprep.subr.mxu0 0.0
      %1133 = vmatpush1.xpose.msra.mxu0 0.0
      %1134 = vmatprep.subr.mxu0 0.0
      %1135 = vmatpush1.xpose.msra.mxu0 0.0
      %1136 = vmatprep.subr.mxu0 0.0
      %1137 = vmatpush1.xpose.msra.mxu0 0.0
      %1138 = vmatprep.subr.mxu0 0.0
      %1139 = vmatpush1.xpose.msra.mxu0 0.0
      %1140 = vmatprep.subr.mxu0 0.0
      %1141 = vmatpush1.xpose.msra.mxu0 0.0
      %1142 = vmatprep.subr.mxu0 0.0
      %1143 = vmatpush1.xpose.msra.mxu0 0.0
      %1144 = vmatprep.subr.mxu0 0.0
      %1145 = vmatpush1.xpose.msra.mxu0 0.0
      %1146 = vmatprep.subr.mxu0 0.0
      %1147 = vmatpush1.xpose.msra.mxu0 0.0
      %1148 = vmatprep.subr.mxu0 0.0
      %1149 = vmatpush1.xpose.msra.mxu0 0.0
      %1150 = vmatprep.subr.mxu0 0.0
      %1151 = vmatpush1.xpose.msra.mxu0 0.0
      %1152 = vmatprep.subr.mxu0 0.0
      %1153 = vmatpush1.xpose.msra.mxu0 0.0
      %1154 = vmatprep.mubr.f32.mxu0 0.0
      %1155 = vmatmul.mubr.f32.gmra.mrb[0].mxu0 %v1082
      %v1156 = vpop.f32.mrb[0].mxu0
      %v1157 = vadd.f32 0.0, %v1156
      %v1158 = vpop.f32.mrb[0].mxu0
      %1159 = vdwg.mxu0
      %v1161 = vsel %vm586, %v684, 0
      %v1164 = vsel %vm586, %v572, 0
      %v1167 = vsel %vm586, %v575, 0
      %1169 = vmatprep.subr.mxu0 0.0
      %1170 = vmatpush1.xpose.msra.mxu0 %v1164
      %1171 = vmatprep.subr.mxu0 0.0
      %1172 = vmatpush1.xpose.msra.mxu0 %v1167
      %1173 = vmatprep.subr.mxu0 0.0
      %1174 = vmatpush1.xpose.msra.mxu0 0.0
      %1175 = vmatprep.subr.mxu0 0.0
      %1176 = vmatpush1.xpose.msra.mxu0 0.0
      %1177 = vmatprep.subr.mxu0 0.0
      %1178 = vmatpush1.xpose.msra.mxu0 0.0
      %1179 = vmatprep.subr.mxu0 0.0
      %1180 = vmatpush1.xpose.msra.mxu0 0.0
      %1181 = vmatprep.subr.mxu0 0.0
      %1182 = vmatpush1.xpose.msra.mxu0 0.0
      %1183 = vmatprep.subr.mxu0 0.0
      %1184 = vmatpush1.xpose.msra.mxu0 0.0
      %1185 = vmatprep.subr.mxu0 0.0
      %1186 = vmatpush1.xpose.msra.mxu0 0.0
      %1187 = vmatprep.subr.mxu0 0.0
      %1188 = vmatpush1.xpose.msra.mxu0 0.0
      %1189 = vmatprep.subr.mxu0 0.0
      %1190 = vmatpush1.xpose.msra.mxu0 0.0
      %1191 = vmatprep.subr.mxu0 0.0
      %1192 = vmatpush1.xpose.msra.mxu0 0.0
      %1193 = vmatprep.subr.mxu0 0.0
      %1194 = vmatpush1.xpose.msra.mxu0 0.0
      %1195 = vmatprep.subr.mxu0 0.0
      %1196 = vmatpush1.xpose.msra.mxu0 0.0
      %1197 = vmatprep.subr.mxu0 0.0
      %1198 = vmatpush1.xpose.msra.mxu0 0.0
      %1199 = vmatprep.subr.mxu0 0.0
      %1200 = vmatpush1.xpose.msra.mxu0 0.0
      %1201 = vmatprep.subr.mxu0 0.0
      %1202 = vmatpush1.xpose.msra.mxu0 0.0
      %1203 = vmatprep.subr.mxu0 0.0
      %1204 = vmatpush1.xpose.msra.mxu0 0.0
      %1205 = vmatprep.subr.mxu0 0.0
      %1206 = vmatpush1.xpose.msra.mxu0 0.0
      %1207 = vmatprep.subr.mxu0 0.0
      %1208 = vmatpush1.xpose.msra.mxu0 0.0
      %1209 = vmatprep.subr.mxu0 0.0
      %1210 = vmatpush1.xpose.msra.mxu0 0.0
      %1211 = vmatprep.subr.mxu0 0.0
      %1212 = vmatpush1.xpose.msra.mxu0 0.0
      %1213 = vmatprep.subr.mxu0 0.0
      %1214 = vmatpush1.xpose.msra.mxu0 0.0
      %1215 = vmatprep.subr.mxu0 0.0
      %1216 = vmatpush1.xpose.msra.mxu0 0.0
      %1217 = vmatprep.subr.mxu0 0.0
      %1218 = vmatpush1.xpose.msra.mxu0 0.0
      %1219 = vmatprep.subr.mxu0 0.0
      %1220 = vmatpush1.xpose.msra.mxu0 0.0
      %1221 = vmatprep.subr.mxu0 0.0
      %1222 = vmatpush1.xpose.msra.mxu0 0.0
      %1223 = vmatprep.subr.mxu0 0.0
      %1224 = vmatpush1.xpose.msra.mxu0 0.0
      %1225 = vmatprep.subr.mxu0 0.0
      %1226 = vmatpush1.xpose.msra.mxu0 0.0
      %1227 = vmatprep.subr.mxu0 0.0
      %1228 = vmatpush1.xpose.msra.mxu0 0.0
      %1229 = vmatprep.subr.mxu0 0.0
      %1230 = vmatpush1.xpose.msra.mxu0 0.0
      %1231 = vmatprep.subr.mxu0 0.0
      %1232 = vmatpush1.xpose.msra.mxu0 0.0
      %1233 = vmatprep.mubr.f32.mxu0 0.0
      %1234 = vmatmul.mubr.f32.gmra.mrb[0].mxu0 %v1161
      %v1235 = vpop.f32.mrb[0].mxu0
      %v1236 = vadd.f32 0.0, %v1235
      %v1237 = vpop.f32.mrb[0].mxu0
      %1238 = vdwg.mxu0
      %v1240 = vsel %vm586, %v685, 0
      %v1243 = vsel %vm586, %v580, 0
      %v1246 = vsel %vm586, %v583, 0
      %1248 = vmatprep.subr.mxu0 0.0
      %1249 = vmatpush1.xpose.msra.mxu0 %v1243
      %1250 = vmatprep.subr.mxu0 0.0
      %1251 = vmatpush1.xpose.msra.mxu0 %v1246
      %1252 = vmatprep.subr.mxu0 0.0
      %1253 = vmatpush1.xpose.msra.mxu0 0.0
      %1254 = vmatprep.subr.mxu0 0.0
      %1255 = vmatpush1.xpose.msra.mxu0 0.0
      %1256 = vmatprep.subr.mxu0 0.0
      %1257 = vmatpush1.xpose.msra.mxu0 0.0
      %1258 = vmatprep.subr.mxu0 0.0
      %1259 = vmatpush1.xpose.msra.mxu0 0.0
      %1260 = vmatprep.subr.mxu0 0.0
      %1261 = vmatpush1.xpose.msra.mxu0 0.0
      %1262 = vmatprep.subr.mxu0 0.0
      %1263 = vmatpush1.xpose.msra.mxu0 0.0
      %1264 = vmatprep.subr.mxu0 0.0
      %1265 = vmatpush1.xpose.msra.mxu0 0.0
      %1266 = vmatprep.subr.mxu0 0.0
      %1267 = vmatpush1.xpose.msra.mxu0 0.0
      %1268 = vmatprep.subr.mxu0 0.0
      %1269 = vmatpush1.xpose.msra.mxu0 0.0
      %1270 = vmatprep.subr.mxu0 0.0
      %1271 = vmatpush1.xpose.msra.mxu0 0.0
      %1272 = vmatprep.subr.mxu0 0.0
      %1273 = vmatpush1.xpose.msra.mxu0 0.0
      %1274 = vmatprep.subr.mxu0 0.0
      %1275 = vmatpush1.xpose.msra.mxu0 0.0
      %1276 = vmatprep.subr.mxu0 0.0
      %1277 = vmatpush1.xpose.msra.mxu0 0.0
      %1278 = vmatprep.subr.mxu0 0.0
      %1279 = vmatpush1.xpose.msra.mxu0 0.0
      %1280 = vmatprep.subr.mxu0 0.0
      %1281 = vmatpush1.xpose.msra.mxu0 0.0
      %1282 = vmatprep.subr.mxu0 0.0
      %1283 = vmatpush1.xpose.msra.mxu0 0.0
      %1284 = vmatprep.subr.mxu0 0.0
      %1285 = vmatpush1.xpose.msra.mxu0 0.0
      %1286 = vmatprep.subr.mxu0 0.0
      %1287 = vmatpush1.xpose.msra.mxu0 0.0
      %1288 = vmatprep.subr.mxu0 0.0
      %1289 = vmatpush1.xpose.msra.mxu0 0.0
      %1290 = vmatprep.subr.mxu0 0.0
      %1291 = vmatpush1.xpose.msra.mxu0 0.0
      %1292 = vmatprep.subr.mxu0 0.0
      %1293 = vmatpush1.xpose.msra.mxu0 0.0
      %1294 = vmatprep.subr.mxu0 0.0
      %1295 = vmatpush1.xpose.msra.mxu0 0.0
      %1296 = vmatprep.subr.mxu0 0.0
      %1297 = vmatpush1.xpose.msra.mxu0 0.0
      %1298 = vmatprep.subr.mxu0 0.0
      %1299 = vmatpush1.xpose.msra.mxu0 0.0
      %1300 = vmatprep.subr.mxu0 0.0
      %1301 = vmatpush1.xpose.msra.mxu0 0.0
      %1302 = vmatprep.subr.mxu0 0.0
      %1303 = vmatpush1.xpose.msra.mxu0 0.0
      %1304 = vmatprep.subr.mxu0 0.0
      %1305 = vmatpush1.xpose.msra.mxu0 0.0
      %1306 = vmatprep.subr.mxu0 0.0
      %1307 = vmatpush1.xpose.msra.mxu0 0.0
      %1308 = vmatprep.subr.mxu0 0.0
      %1309 = vmatpush1.xpose.msra.mxu0 0.0
      %1310 = vmatprep.subr.mxu0 0.0
      %1311 = vmatpush1.xpose.msra.mxu0 0.0
      %1312 = vmatprep.mubr.f32.mxu0 0.0
      %1313 = vmatmul.mubr.f32.gmra.mrb[0].mxu0 %v1240
      %v1314 = vpop.f32.mrb[0].mxu0
      %v1315 = vadd.f32 0.0, %v1314
      %v1316 = vpop.f32.mrb[0].mxu0
      %1317 = vdwg.mxu0
      %v1318 = vlaneseq
      %v1319 = vand.u32 %v1318, 127
      %vm1320 = vcmask 126976
      %v1321 = vsel %vm1320, %v762, -inf
      %1322 = vmax.xlane.f32.xlu0 %v1321
      %v1323 = vpop.xlane.xlu0 %1322
      %v1324 = vsel %vm1320, %v841, -inf
      %1325 = vmax.xlane.f32.xlu0 %v1324
      %v1326 = vpop.xlane.xlu0 %1325
      %v1327 = vsel %vm1320, %v920, -inf
      %1328 = vmax.xlane.f32.xlu0 %v1327
      %v1329 = vpop.xlane.xlu0 %1328
      %v1330 = vsel %vm1320, %v999, -inf
      %1331 = vmax.xlane.f32.xlu0 %v1330
      %v1332 = vpop.xlane.xlu0 %1331
      %v1333 = vsel %vm1320, %v1078, -inf
      %1334 = vmax.xlane.f32.xlu0 %v1333
      %v1335 = vpop.xlane.xlu0 %1334
      %v1336 = vsel %vm1320, %v1157, -inf
      %1337 = vmax.xlane.f32.xlu0 %v1336
      %v1338 = vpop.xlane.xlu0 %1337
      %v1339 = vsel %vm1320, %v1236, -inf
      %1340 = vmax.xlane.f32.xlu0 %v1339
      %v1341 = vpop.xlane.xlu0 %1340
      %v1342 = vsel %vm1320, %v1315, -inf
      %1343 = vmax.xlane.f32.xlu0 %v1342
      %v1344 = vpop.xlane.xlu0 %1343
      %vm1345 = vcmp.eq.f32.partialorder %v762, %v1323
      %vm1346 = vcmp.eq.f32.partialorder %v841, %v1326
      %vm1347 = vcmp.eq.f32.partialorder %v920, %v1329
      %vm1348 = vcmp.eq.f32.partialorder %v999, %v1332
      %vm1349 = vcmp.eq.f32.partialorder %v1078, %v1335
      %vm1350 = vcmp.eq.f32.partialorder %v1157, %v1338
      %vm1351 = vcmp.eq.f32.partialorder %v1236, %v1341
      %vm1352 = vcmp.eq.f32.partialorder %v1315, %v1344
      %v1353 = vsel %vm1345, %v1319, 16
      %v1354 = vsel %vm1346, %v1319, 16
      %v1355 = vsel %vm1347, %v1319, 16
      %v1356 = vsel %vm1348, %v1319, 16
      %v1357 = vsel %vm1349, %v1319, 16
      %v1358 = vsel %vm1350, %v1319, 16
      %v1359 = vsel %vm1351, %v1319, 16
      %v1360 = vsel %vm1352, %v1319, 16
      %v1361 = vsel %vm1320, %v1353, 2147483647
      %v1362 = vand.u32 %v1361, 65535
      %v1363 = vshra.s32 %v1361, 16
      %v1364 = vcvt.s32.f32 %v1362
      %v1365 = vcvt.s32.f32 %v1363
      %1366 = vmin.xlane.f32.xlu0 %v1365
      %v1367 = vpop.xlane.xlu0 %1366
      %vm1368 = vcmp.eq.f32.partialorder %v1365, %v1367
      %v1369 = vsel %vm1368, %v1364, inf
      %1370 = vmin.xlane.f32.xlu0 %v1369
      %v1371 = vpop.xlane.xlu0 %1370
      %v1372 = vcvt.f32.s32 %v1371
      %v1373 = vcvt.f32.s32 %v1367
      %v1374 = vshll.u32 %v1373, 16
      %v1375 = vadd.s32 %v1374, %v1372
      %v1376 = vsel %vm1320, %v1354, 2147483647
      %v1377 = vand.u32 %v1376, 65535
      %v1378 = vshra.s32 %v1376, 16
      %v1379 = vcvt.s32.f32 %v1377
      %v1380 = vcvt.s32.f32 %v1378
      %1381 = vmin.xlane.f32.xlu0 %v1380
      %v1382 = vpop.xlane.xlu0 %1381
      %vm1383 = vcmp.eq.f32.partialorder %v1380, %v1382
      %v1384 = vsel %vm1383, %v1379, inf
      %1385 = vmin.xlane.f32.xlu0 %v1384
      %v1386 = vpop.xlane.xlu0 %1385
      %v1387 = vcvt.f32.s32 %v1386
      %v1388 = vcvt.f32.s32 %v1382
      %v1389 = vshll.u32 %v1388, 16
      %v1390 = vadd.s32 %v1389, %v1387
      %v1391 = vsel %vm1320, %v1355, 2147483647
      %v1392 = vand.u32 %v1391, 65535
      %v1393 = vshra.s32 %v1391, 16
      %v1394 = vcvt.s32.f32 %v1392
      %v1395 = vcvt.s32.f32 %v1393
      %1396 = vmin.xlane.f32.xlu0 %v1395
      %v1397 = vpop.xlane.xlu0 %1396
      %vm1398 = vcmp.eq.f32.partialorder %v1395, %v1397
      %v1399 = vsel %vm1398, %v1394, inf
      %1400 = vmin.xlane.f32.xlu0 %v1399
      %v1401 = vpop.xlane.xlu0 %1400
      %v1402 = vcvt.f32.s32 %v1401
      %v1403 = vcvt.f32.s32 %v1397
      %v1404 = vshll.u32 %v1403, 16
      %v1405 = vadd.s32 %v1404, %v1402
      %v1406 = vsel %vm1320, %v1356, 2147483647
      %v1407 = vand.u32 %v1406, 65535
      %v1408 = vshra.s32 %v1406, 16
      %v1409 = vcvt.s32.f32 %v1407
      %v1410 = vcvt.s32.f32 %v1408
      %1411 = vmin.xlane.f32.xlu0 %v1410
      %v1412 = vpop.xlane.xlu0 %1411
      %vm1413 = vcmp.eq.f32.partialorder %v1410, %v1412
      %v1414 = vsel %vm1413, %v1409, inf
      %1415 = vmin.xlane.f32.xlu0 %v1414
      %v1416 = vpop.xlane.xlu0 %1415
      %v1417 = vcvt.f32.s32 %v1416
      %v1418 = vcvt.f32.s32 %v1412
      %v1419 = vshll.u32 %v1418, 16
      %v1420 = vadd.s32 %v1419, %v1417
      %v1421 = vsel %vm1320, %v1357, 2147483647
      %v1422 = vand.u32 %v1421, 65535
      %v1423 = vshra.s32 %v1421, 16
      %v1424 = vcvt.s32.f32 %v1422
      %v1425 = vcvt.s32.f32 %v1423
      %1426 = vmin.xlane.f32.xlu0 %v1425
      %v1427 = vpop.xlane.xlu0 %1426
      %vm1428 = vcmp.eq.f32.partialorder %v1425, %v1427
      %v1429 = vsel %vm1428, %v1424, inf
      %1430 = vmin.xlane.f32.xlu0 %v1429
      %v1431 = vpop.xlane.xlu0 %1430
      %v1432 = vcvt.f32.s32 %v1431
      %v1433 = vcvt.f32.s32 %v1427
      %v1434 = vshll.u32 %v1433, 16
      %v1435 = vadd.s32 %v1434, %v1432
      %v1436 = vsel %vm1320, %v1358, 2147483647
      %v1437 = vand.u32 %v1436, 65535
      %v1438 = vshra.s32 %v1436, 16
      %v1439 = vcvt.s32.f32 %v1437
      %v1440 = vcvt.s32.f32 %v1438
      %1441 = vmin.xlane.f32.xlu0 %v1440
      %v1442 = vpop.xlane.xlu0 %1441
      %vm1443 = vcmp.eq.f32.partialorder %v1440, %v1442
      %v1444 = vsel %vm1443, %v1439, inf
      %1445 = vmin.xlane.f32.xlu0 %v1444
      %v1446 = vpop.xlane.xlu0 %1445
      %v1447 = vcvt.f32.s32 %v1446
      %v1448 = vcvt.f32.s32 %v1442
      %v1449 = vshll.u32 %v1448, 16
      %v1450 = vadd.s32 %v1449, %v1447
      %v1451 = vsel %vm1320, %v1359, 2147483647
      %v1452 = vand.u32 %v1451, 65535
      %v1453 = vshra.s32 %v1451, 16
      %v1454 = vcvt.s32.f32 %v1452
      %v1455 = vcvt.s32.f32 %v1453
      %1456 = vmin.xlane.f32.xlu0 %v1455
      %v1457 = vpop.xlane.xlu0 %1456
      %vm1458 = vcmp.eq.f32.partialorder %v1455, %v1457
      %v1459 = vsel %vm1458, %v1454, inf
      %1460 = vmin.xlane.f32.xlu0 %v1459
      %v1461 = vpop.xlane.xlu0 %1460
      %v1462 = vcvt.f32.s32 %v1461
      %v1463 = vcvt.f32.s32 %v1457
      %v1464 = vshll.u32 %v1463, 16
      %v1465 = vadd.s32 %v1464, %v1462
      %v1466 = vsel %vm1320, %v1360, 2147483647
      %v1467 = vand.u32 %v1466, 65535
      %v1468 = vshra.s32 %v1466, 16
      %v1469 = vcvt.s32.f32 %v1467
      %v1470 = vcvt.s32.f32 %v1468
      %1471 = vmin.xlane.f32.xlu0 %v1470
      %v1472 = vpop.xlane.xlu0 %1471
      %vm1473 = vcmp.eq.f32.partialorder %v1470, %v1472
      %v1474 = vsel %vm1473, %v1469, inf
      %1475 = vmin.xlane.f32.xlu0 %v1474
      %v1476 = vpop.xlane.xlu0 %1475
      %v1477 = vcvt.f32.s32 %v1476
      %v1478 = vcvt.f32.s32 %v1472
      %v1479 = vshll.u32 %v1478, 16
      %v1480 = vadd.s32 %v1479, %v1477
      %v1481 = vshra.s32 %v1375, 2
      %v1482 = vshra.s32 %v1390, 2
      %v1483 = vshra.s32 %v1405, 2
      %v1484 = vshra.s32 %v1420, 2
      %v1485 = vshra.s32 %v1435, 2
      %v1486 = vshra.s32 %v1450, 2
      %v1487 = vshra.s32 %v1465, 2
      %v1488 = vshra.s32 %v1480, 2
      %v1489 = vand.u32 %v1375, 3
      %v1490 = vand.u32 %v1390, 3
      %v1491 = vand.u32 %v1405, 3
      %v1492 = vand.u32 %v1420, 3
      %v1493 = vand.u32 %v1435, 3
      %v1494 = vand.u32 %v1450, 3
      %v1495 = vand.u32 %v1465, 3
      %v1496 = vand.u32 %v1480, 3
      %v1497 = vshra.s32 %v1319, 2
      %v1498 = vand.u32 %v1319, 3
      %v1499 = vsub.s32 %v1481, 1
      %v1500 = vsub.s32 %v1482, 1
      %v1501 = vsub.s32 %v1483, 1
      %v1502 = vsub.s32 %v1484, 1
      %v1503 = vsub.s32 %v1485, 1
      %v1504 = vsub.s32 %v1486, 1
      %v1505 = vsub.s32 %v1487, 1
      %v1506 = vsub.s32 %v1488, 1
      %vm1507 = vcmp.ge.s32.totalorder %v1497, %v1499
      %vm1508 = vcmp.ge.s32.totalorder %v1497, %v1500
      %vm1509 = vcmp.ge.s32.totalorder %v1497, %v1501
      %vm1510 = vcmp.ge.s32.totalorder %v1497, %v1502
      %vm1511 = vcmp.ge.s32.totalorder %v1497, %v1503
      %vm1512 = vcmp.ge.s32.totalorder %v1497, %v1504
      %vm1513 = vcmp.ge.s32.totalorder %v1497, %v1505
      %vm1514 = vcmp.ge.s32.totalorder %v1497, %v1506
      %v1515 = vadd.s32 %v1481, 1
      %v1516 = vadd.s32 %v1482, 1
      %v1517 = vadd.s32 %v1483, 1
      %v1518 = vadd.s32 %v1484, 1
      %v1519 = vadd.s32 %v1485, 1
      %v1520 = vadd.s32 %v1486, 1
      %v1521 = vadd.s32 %v1487, 1
      %v1522 = vadd.s32 %v1488, 1
      %vm1523 = vcmp.le.s32.totalorder %v1497, %v1515
      %vm1524 = vcmp.le.s32.totalorder %v1497, %v1516
      %vm1525 = vcmp.le.s32.totalorder %v1497, %v1517
      %vm1526 = vcmp.le.s32.totalorder %v1497, %v1518
      %vm1527 = vcmp.le.s32.totalorder %v1497, %v1519
      %vm1528 = vcmp.le.s32.totalorder %v1497, %v1520
      %vm1529 = vcmp.le.s32.totalorder %v1497, %v1521
      %vm1530 = vcmp.le.s32.totalorder %v1497, %v1522
      %vm1531 = vmand %vm1507, %vm1523
      %vm1532 = vmand %vm1508, %vm1524
      %vm1533 = vmand %vm1509, %vm1525
      %vm1534 = vmand %vm1510, %vm1526
      %vm1535 = vmand %vm1511, %vm1527
      %vm1536 = vmand %vm1512, %vm1528
      %vm1537 = vmand %vm1513, %vm1529
      %vm1538 = vmand %vm1514, %vm1530
      %v1539 = vsub.s32 %v1489, 1
      %v1540 = vsub.s32 %v1490, 1
      %v1541 = vsub.s32 %v1491, 1
      %v1542 = vsub.s32 %v1492, 1
      %v1543 = vsub.s32 %v1493, 1
      %v1544 = vsub.s32 %v1494, 1
      %v1545 = vsub.s32 %v1495, 1
      %v1546 = vsub.s32 %v1496, 1
      %vm1547 = vcmp.ge.s32.totalorder %v1498, %v1539
      %vm1548 = vcmp.ge.s32.totalorder %v1498, %v1540
      %vm1549 = vcmp.ge.s32.totalorder %v1498, %v1541
      %vm1550 = vcmp.ge.s32.totalorder %v1498, %v1542
      %vm1551 = vcmp.ge.s32.totalorder %v1498, %v1543
      %vm1552 = vcmp.ge.s32.totalorder %v1498, %v1544
      %vm1553 = vcmp.ge.s32.totalorder %v1498, %v1545
      %vm1554 = vcmp.ge.s32.totalorder %v1498, %v1546
      %vm1555 = vmand %vm1531, %vm1547
      %vm1556 = vmand %vm1532, %vm1548
      %vm1557 = vmand %vm1533, %vm1549
      %vm1558 = vmand %vm1534, %vm1550
      %vm1559 = vmand %vm1535, %vm1551
      %vm1560 = vmand %vm1536, %vm1552
      %vm1561 = vmand %vm1537, %vm1553
      %vm1562 = vmand %vm1538, %vm1554
      %v1563 = vadd.s32 %v1489, 1
      %v1564 = vadd.s32 %v1490, 1
      %v1565 = vadd.s32 %v1491, 1
      %v1566 = vadd.s32 %v1492, 1
      %v1567 = vadd.s32 %v1493, 1
      %v1568 = vadd.s32 %v1494, 1
      %v1569 = vadd.s32 %v1495, 1
      %v1570 = vadd.s32 %v1496, 1
      %vm1571 = vcmp.le.s32.totalorder %v1498, %v1563
      %vm1572 = vcmp.le.s32.totalorder %v1498, %v1564
      %vm1573 = vcmp.le.s32.totalorder %v1498, %v1565
      %vm1574 = vcmp.le.s32.totalorder %v1498, %v1566
      %vm1575 = vcmp.le.s32.totalorder %v1498, %v1567
      %vm1576 = vcmp.le.s32.totalorder %v1498, %v1568
      %vm1577 = vcmp.le.s32.totalorder %v1498, %v1569
      %vm1578 = vcmp.le.s32.totalorder %v1498, %v1570
      %vm1579 = vmand %vm1555, %vm1571
      %vm1580 = vmand %vm1556, %vm1572
      %vm1581 = vmand %vm1557, %vm1573
      %vm1582 = vmand %vm1558, %vm1574
      %vm1583 = vmand %vm1559, %vm1575
      %vm1584 = vmand %vm1560, %vm1576
      %vm1585 = vmand %vm1561, %vm1577
      %vm1586 = vmand %vm1562, %vm1578
      %v1587 = vsel %vm1579, 1, 0
      %v1588 = vsel %vm1580, 1, 0
      %v1589 = vsel %vm1581, 1, 0
      %v1590 = vsel %vm1582, 1, 0
      %v1591 = vsel %vm1583, 1, 0
      %v1592 = vsel %vm1584, 1, 0
      %v1593 = vsel %vm1585, 1, 0
      %v1594 = vsel %vm1586, 1, 0
      %v1595 = vcvt.s32.f32 %v1587
      %v1596 = vcvt.s32.f32 %v1588
      %v1597 = vcvt.s32.f32 %v1589
      %v1598 = vcvt.s32.f32 %v1590
      %v1599 = vcvt.s32.f32 %v1591
      %v1600 = vcvt.s32.f32 %v1592
      %v1601 = vcvt.s32.f32 %v1593
      %v1602 = vcvt.s32.f32 %v1594
      %vm1603 = vcmask 130048
      %v1605 = vsel %vm1603, %v1595, 0
      %1607 = vmatprep.subr.mxu0 0.0
      %1608 = vmatpush1.msra.mxu0 %v524
      %1609 = vmatprep.subr.mxu0 0.0
      %1610 = vmatpush1.msra.mxu0 %v527
      %1611 = vmatprep.subr.mxu0 0.0
      %1612 = vmatpush1.msra.mxu0 0.0
      %1613 = vmatprep.subr.mxu0 0.0
      %1614 = vmatpush1.msra.mxu0 0.0
      %1615 = vmatprep.subr.mxu0 0.0
      %1616 = vmatpush1.msra.mxu0 0.0
      %1617 = vmatprep.subr.mxu0 0.0
      %1618 = vmatpush1.msra.mxu0 0.0
      %1619 = vmatprep.subr.mxu0 0.0
      %1620 = vmatpush1.msra.mxu0 0.0
      %1621 = vmatprep.subr.mxu0 0.0
      %1622 = vmatpush1.msra.mxu0 0.0
      %1623 = vmatprep.subr.mxu0 0.0
      %1624 = vmatpush1.msra.mxu0 0.0
      %1625 = vmatprep.subr.mxu0 0.0
      %1626 = vmatpush1.msra.mxu0 0.0
      %1627 = vmatprep.subr.mxu0 0.0
      %1628 = vmatpush1.msra.mxu0 0.0
      %1629 = vmatprep.subr.mxu0 0.0
      %1630 = vmatpush1.msra.mxu0 0.0
      %1631 = vmatprep.subr.mxu0 0.0
      %1632 = vmatpush1.msra.mxu0 0.0
      %1633 = vmatprep.subr.mxu0 0.0
      %1634 = vmatpush1.msra.mxu0 0.0
      %1635 = vmatprep.subr.mxu0 0.0
      %1636 = vmatpush1.msra.mxu0 0.0
      %1637 = vmatprep.subr.mxu0 0.0
      %1638 = vmatpush1.msra.mxu0 0.0
      %1639 = vmatprep.subr.mxu0 0.0
      %1640 = vmatpush1.msra.mxu0 0.0
      %1641 = vmatprep.subr.mxu0 0.0
      %1642 = vmatpush1.msra.mxu0 0.0
      %1643 = vmatprep.subr.mxu0 0.0
      %1644 = vmatpush1.msra.mxu0 0.0
      %1645 = vmatprep.subr.mxu0 0.0
      %1646 = vmatpush1.msra.mxu0 0.0
      %1647 = vmatprep.subr.mxu0 0.0
      %1648 = vmatpush1.msra.mxu0 0.0
      %1649 = vmatprep.subr.mxu0 0.0
      %1650 = vmatpush1.msra.mxu0 0.0
      %1651 = vmatprep.subr.mxu0 0.0
      %1652 = vmatpush1.msra.mxu0 0.0
      %1653 = vmatprep.subr.mxu0 0.0
      %1654 = vmatpush1.msra.mxu0 0.0
      %1655 = vmatprep.subr.mxu0 0.0
      %1656 = vmatpush1.msra.mxu0 0.0
      %1657 = vmatprep.subr.mxu0 0.0
      %1658 = vmatpush1.msra.mxu0 0.0
      %1659 = vmatprep.subr.mxu0 0.0
      %1660 = vmatpush1.msra.mxu0 0.0
      %1661 = vmatprep.subr.mxu0 0.0
      %1662 = vmatpush1.msra.mxu0 0.0
      %1663 = vmatprep.subr.mxu0 0.0
      %1664 = vmatpush1.msra.mxu0 0.0
      %1665 = vmatprep.subr.mxu0 0.0
      %1666 = vmatpush1.msra.mxu0 0.0
      %1667 = vmatprep.subr.mxu0 0.0
      %1668 = vmatpush1.msra.mxu0 0.0
      %1669 = vmatprep.subr.mxu0 0.0
      %1670 = vmatpush1.msra.mxu0 0.0
      %1671 = vmatprep.mubr.f32.mxu0 0.0
      %1672 = vmatmul.mubr.f32.gmra.mrb[0].mxu0 %v1605
      %v1673 = vpop.f32.mrb[0].mxu0
      %v1674 = vadd.f32 0.0, %v1673
      %v1675 = vpop.f32.mrb[0].mxu0
      %1676 = vdwg.mxu0
      %v1678 = vsel %vm1603, %v1596, 0
      %1680 = vmatprep.subr.mxu0 0.0
      %1681 = vmatpush1.msra.mxu0 %v532
      %1682 = vmatprep.subr.mxu0 0.0
      %1683 = vmatpush1.msra.mxu0 %v535
      %1684 = vmatprep.subr.mxu0 0.0
      %1685 = vmatpush1.msra.mxu0 0.0
      %1686 = vmatprep.subr.mxu0 0.0
      %1687 = vmatpush1.msra.mxu0 0.0
      %1688 = vmatprep.subr.mxu0 0.0
      %1689 = vmatpush1.msra.mxu0 0.0
      %1690 = vmatprep.subr.mxu0 0.0
      %1691 = vmatpush1.msra.mxu0 0.0
      %1692 = vmatprep.subr.mxu0 0.0
      %1693 = vmatpush1.msra.mxu0 0.0
      %1694 = vmatprep.subr.mxu0 0.0
      %1695 = vmatpush1.msra.mxu0 0.0
      %1696 = vmatprep.subr.mxu0 0.0
      %1697 = vmatpush1.msra.mxu0 0.0
      %1698 = vmatprep.subr.mxu0 0.0
      %1699 = vmatpush1.msra.mxu0 0.0
      %1700 = vmatprep.subr.mxu0 0.0
      %1701 = vmatpush1.msra.mxu0 0.0
      %1702 = vmatprep.subr.mxu0 0.0
      %1703 = vmatpush1.msra.mxu0 0.0
      %1704 = vmatprep.subr.mxu0 0.0
      %1705 = vmatpush1.msra.mxu0 0.0
      %1706 = vmatprep.subr.mxu0 0.0
      %1707 = vmatpush1.msra.mxu0 0.0
      %1708 = vmatprep.subr.mxu0 0.0
      %1709 = vmatpush1.msra.mxu0 0.0
      %1710 = vmatprep.subr.mxu0 0.0
      %1711 = vmatpush1.msra.mxu0 0.0
      %1712 = vmatprep.subr.mxu0 0.0
      %1713 = vmatpush1.msra.mxu0 0.0
      %1714 = vmatprep.subr.mxu0 0.0
      %1715 = vmatpush1.msra.mxu0 0.0
      %1716 = vmatprep.subr.mxu0 0.0
      %1717 = vmatpush1.msra.mxu0 0.0
      %1718 = vmatprep.subr.mxu0 0.0
      %1719 = vmatpush1.msra.mxu0 0.0
      %1720 = vmatprep.subr.mxu0 0.0
      %1721 = vmatpush1.msra.mxu0 0.0
      %1722 = vmatprep.subr.mxu0 0.0
      %1723 = vmatpush1.msra.mxu0 0.0
      %1724 = vmatprep.subr.mxu0 0.0
      %1725 = vmatpush1.msra.mxu0 0.0
      %1726 = vmatprep.subr.mxu0 0.0
      %1727 = vmatpush1.msra.mxu0 0.0
      %1728 = vmatprep.subr.mxu0 0.0
      %1729 = vmatpush1.msra.mxu0 0.0
      %1730 = vmatprep.subr.mxu0 0.0
      %1731 = vmatpush1.msra.mxu0 0.0
      %1732 = vmatprep.subr.mxu0 0.0
      %1733 = vmatpush1.msra.mxu0 0.0
      %1734 = vmatprep.subr.mxu0 0.0
      %1735 = vmatpush1.msra.mxu0 0.0
      %1736 = vmatprep.subr.mxu0 0.0
      %1737 = vmatpush1.msra.mxu0 0.0
      %1738 = vmatprep.subr.mxu0 0.0
      %1739 = vmatpush1.msra.mxu0 0.0
      %1740 = vmatprep.subr.mxu0 0.0
      %1741 = vmatpush1.msra.mxu0 0.0
      %1742 = vmatprep.subr.mxu0 0.0
      %1743 = vmatpush1.msra.mxu0 0.0
      %1744 = vmatprep.mubr.f32.mxu0 0.0
      %1745 = vmatmul.mubr.f32.gmra.mrb[0].mxu0 %v1678
      %v1746 = vpop.f32.mrb[0].mxu0
      %v1747 = vadd.f32 0.0, %v1746
      %v1748 = vpop.f32.mrb[0].mxu0
      %1749 = vdwg.mxu0
      %v1751 = vsel %vm1603, %v1597, 0
      %1753 = vmatprep.subr.mxu0 0.0
      %1754 = vmatpush1.msra.mxu0 %v540
      %1755 = vmatprep.subr.mxu0 0.0
      %1756 = vmatpush1.msra.mxu0 %v543
      %1757 = vmatprep.subr.mxu0 0.0
      %1758 = vmatpush1.msra.mxu0 0.0
      %1759 = vmatprep.subr.mxu0 0.0
      %1760 = vmatpush1.msra.mxu0 0.0
      %1761 = vmatprep.subr.mxu0 0.0
      %1762 = vmatpush1.msra.mxu0 0.0
      %1763 = vmatprep.subr.mxu0 0.0
      %1764 = vmatpush1.msra.mxu0 0.0
      %1765 = vmatprep.subr.mxu0 0.0
      %1766 = vmatpush1.msra.mxu0 0.0
      %1767 = vmatprep.subr.mxu0 0.0
      %1768 = vmatpush1.msra.mxu0 0.0
      %1769 = vmatprep.subr.mxu0 0.0
      %1770 = vmatpush1.msra.mxu0 0.0
      %1771 = vmatprep.subr.mxu0 0.0
      %1772 = vmatpush1.msra.mxu0 0.0
      %1773 = vmatprep.subr.mxu0 0.0
      %1774 = vmatpush1.msra.mxu0 0.0
      %1775 = vmatprep.subr.mxu0 0.0
      %1776 = vmatpush1.msra.mxu0 0.0
      %1777 = vmatprep.subr.mxu0 0.0
      %1778 = vmatpush1.msra.mxu0 0.0
      %1779 = vmatprep.subr.mxu0 0.0
      %1780 = vmatpush1.msra.mxu0 0.0
      %1781 = vmatprep.subr.mxu0 0.0
      %1782 = vmatpush1.msra.mxu0 0.0
      %1783 = vmatprep.subr.mxu0 0.0
      %1784 = vmatpush1.msra.mxu0 0.0
      %1785 = vmatprep.subr.mxu0 0.0
      %1786 = vmatpush1.msra.mxu0 0.0
      %1787 = vmatprep.subr.mxu0 0.0
      %1788 = vmatpush1.msra.mxu0 0.0
      %1789 = vmatprep.subr.mxu0 0.0
      %1790 = vmatpush1.msra.mxu0 0.0
      %1791 = vmatprep.subr.mxu0 0.0
      %1792 = vmatpush1.msra.mxu0 0.0
      %1793 = vmatprep.subr.mxu0 0.0
      %1794 = vmatpush1.msra.mxu0 0.0
      %1795 = vmatprep.subr.mxu0 0.0
      %1796 = vmatpush1.msra.mxu0 0.0
      %1797 = vmatprep.subr.mxu0 0.0
      %1798 = vmatpush1.msra.mxu0 0.0
      %1799 = vmatprep.subr.mxu0 0.0
      %1800 = vmatpush1.msra.mxu0 0.0
      %1801 = vmatprep.subr.mxu0 0.0
      %1802 = vmatpush1.msra.mxu0 0.0
      %1803 = vmatprep.subr.mxu0 0.0
      %1804 = vmatpush1.msra.mxu0 0.0
      %1805 = vmatprep.subr.mxu0 0.0
      %1806 = vmatpush1.msra.mxu0 0.0
      %1807 = vmatprep.subr.mxu0 0.0
      %1808 = vmatpush1.msra.mxu0 0.0
      %1809 = vmatprep.subr.mxu0 0.0
      %1810 = vmatpush1.msra.mxu0 0.0
      %1811 = vmatprep.subr.mxu0 0.0
      %1812 = vmatpush1.msra.mxu0 0.0
      %1813 = vmatprep.subr.mxu0 0.0
      %1814 = vmatpush1.msra.mxu0 0.0
      %1815 = vmatprep.subr.mxu0 0.0
      %1816 = vmatpush1.msra.mxu0 0.0
      %1817 = vmatprep.mubr.f32.mxu0 0.0
      %1818 = vmatmul.mubr.f32.gmra.mrb[0].mxu0 %v1751
      %v1819 = vpop.f32.mrb[0].mxu0
      %v1820 = vadd.f32 0.0, %v1819
      %v1821 = vpop.f32.mrb[0].mxu0
      %1822 = vdwg.mxu0
      %v1824 = vsel %vm1603, %v1598, 0
      %1826 = vmatprep.subr.mxu0 0.0
      %1827 = vmatpush1.msra.mxu0 %v548
      %1828 = vmatprep.subr.mxu0 0.0
      %1829 = vmatpush1.msra.mxu0 %v551
      %1830 = vmatprep.subr.mxu0 0.0
      %1831 = vmatpush1.msra.mxu0 0.0
      %1832 = vmatprep.subr.mxu0 0.0
      %1833 = vmatpush1.msra.mxu0 0.0
      %1834 = vmatprep.subr.mxu0 0.0
      %1835 = vmatpush1.msra.mxu0 0.0
      %1836 = vmatprep.subr.mxu0 0.0
      %1837 = vmatpush1.msra.mxu0 0.0
      %1838 = vmatprep.subr.mxu0 0.0
      %1839 = vmatpush1.msra.mxu0 0.0
      %1840 = vmatprep.subr.mxu0 0.0
      %1841 = vmatpush1.msra.mxu0 0.0
      %1842 = vmatprep.subr.mxu0 0.0
      %1843 = vmatpush1.msra.mxu0 0.0
      %1844 = vmatprep.subr.mxu0 0.0
      %1845 = vmatpush1.msra.mxu0 0.0
      %1846 = vmatprep.subr.mxu0 0.0
      %1847 = vmatpush1.msra.mxu0 0.0
      %1848 = vmatprep.subr.mxu0 0.0
      %1849 = vmatpush1.msra.mxu0 0.0
      %1850 = vmatprep.subr.mxu0 0.0
      %1851 = vmatpush1.msra.mxu0 0.0
      %1852 = vmatprep.subr.mxu0 0.0
      %1853 = vmatpush1.msra.mxu0 0.0
      %1854 = vmatprep.subr.mxu0 0.0
      %1855 = vmatpush1.msra.mxu0 0.0
      %1856 = vmatprep.subr.mxu0 0.0
      %1857 = vmatpush1.msra.mxu0 0.0
      %1858 = vmatprep.subr.mxu0 0.0
      %1859 = vmatpush1.msra.mxu0 0.0
      %1860 = vmatprep.subr.mxu0 0.0
      %1861 = vmatpush1.msra.mxu0 0.0
      %1862 = vmatprep.subr.mxu0 0.0
      %1863 = vmatpush1.msra.mxu0 0.0
      %1864 = vmatprep.subr.mxu0 0.0
      %1865 = vmatpush1.msra.mxu0 0.0
      %1866 = vmatprep.subr.mxu0 0.0
      %1867 = vmatpush1.msra.mxu0 0.0
      %1868 = vmatprep.subr.mxu0 0.0
      %1869 = vmatpush1.msra.mxu0 0.0
      %1870 = vmatprep.subr.mxu0 0.0
      %1871 = vmatpush1.msra.mxu0 0.0
      %1872 = vmatprep.subr.mxu0 0.0
      %1873 = vmatpush1.msra.mxu0 0.0
      %1874 = vmatprep.subr.mxu0 0.0
      %1875 = vmatpush1.msra.mxu0 0.0
      %1876 = vmatprep.subr.mxu0 0.0
      %1877 = vmatpush1.msra.mxu0 0.0
      %1878 = vmatprep.subr.mxu0 0.0
      %1879 = vmatpush1.msra.mxu0 0.0
      %1880 = vmatprep.subr.mxu0 0.0
      %1881 = vmatpush1.msra.mxu0 0.0
      %1882 = vmatprep.subr.mxu0 0.0
      %1883 = vmatpush1.msra.mxu0 0.0
      %1884 = vmatprep.subr.mxu0 0.0
      %1885 = vmatpush1.msra.mxu0 0.0
      %1886 = vmatprep.subr.mxu0 0.0
      %1887 = vmatpush1.msra.mxu0 0.0
      %1888 = vmatprep.subr.mxu0 0.0
      %1889 = vmatpush1.msra.mxu0 0.0
      %1890 = vmatprep.mubr.f32.mxu0 0.0
      %1891 = vmatmul.mubr.f32.gmra.mrb[0].mxu0 %v1824
      %v1892 = vpop.f32.mrb[0].mxu0
      %v1893 = vadd.f32 0.0, %v1892
      %v1894 = vpop.f32.mrb[0].mxu0
      %1895 = vdwg.mxu0
      %v1897 = vsel %vm1603, %v1599, 0
      %1899 = vmatprep.subr.mxu0 0.0
      %1900 = vmatpush1.msra.mxu0 %v556
      %1901 = vmatprep.subr.mxu0 0.0
      %1902 = vmatpush1.msra.mxu0 %v559
      %1903 = vmatprep.subr.mxu0 0.0
      %1904 = vmatpush1.msra.mxu0 0.0
      %1905 = vmatprep.subr.mxu0 0.0
      %1906 = vmatpush1.msra.mxu0 0.0
      %1907 = vmatprep.subr.mxu0 0.0
      %1908 = vmatpush1.msra.mxu0 0.0
      %1909 = vmatprep.subr.mxu0 0.0
      %1910 = vmatpush1.msra.mxu0 0.0
      %1911 = vmatprep.subr.mxu0 0.0
      %1912 = vmatpush1.msra.mxu0 0.0
      %1913 = vmatprep.subr.mxu0 0.0
      %1914 = vmatpush1.msra.mxu0 0.0
      %1915 = vmatprep.subr.mxu0 0.0
      %1916 = vmatpush1.msra.mxu0 0.0
      %1917 = vmatprep.subr.mxu0 0.0
      %1918 = vmatpush1.msra.mxu0 0.0
      %1919 = vmatprep.subr.mxu0 0.0
      %1920 = vmatpush1.msra.mxu0 0.0
      %1921 = vmatprep.subr.mxu0 0.0
      %1922 = vmatpush1.msra.mxu0 0.0
      %1923 = vmatprep.subr.mxu0 0.0
      %1924 = vmatpush1.msra.mxu0 0.0
      %1925 = vmatprep.subr.mxu0 0.0
      %1926 = vmatpush1.msra.mxu0 0.0
      %1927 = vmatprep.subr.mxu0 0.0
      %1928 = vmatpush1.msra.mxu0 0.0
      %1929 = vmatprep.subr.mxu0 0.0
      %1930 = vmatpush1.msra.mxu0 0.0
      %1931 = vmatprep.subr.mxu0 0.0
      %1932 = vmatpush1.msra.mxu0 0.0
      %1933 = vmatprep.subr.mxu0 0.0
      %1934 = vmatpush1.msra.mxu0 0.0
      %1935 = vmatprep.subr.mxu0 0.0
      %1936 = vmatpush1.msra.mxu0 0.0
      %1937 = vmatprep.subr.mxu0 0.0
      %1938 = vmatpush1.msra.mxu0 0.0
      %1939 = vmatprep.subr.mxu0 0.0
      %1940 = vmatpush1.msra.mxu0 0.0
      %1941 = vmatprep.subr.mxu0 0.0
      %1942 = vmatpush1.msra.mxu0 0.0
      %1943 = vmatprep.subr.mxu0 0.0
      %1944 = vmatpush1.msra.mxu0 0.0
      %1945 = vmatprep.subr.mxu0 0.0
      %1946 = vmatpush1.msra.mxu0 0.0
      %1947 = vmatprep.subr.mxu0 0.0
      %1948 = vmatpush1.msra.mxu0 0.0
      %1949 = vmatprep.subr.mxu0 0.0
      %1950 = vmatpush1.msra.mxu0 0.0
      %1951 = vmatprep.subr.mxu0 0.0
      %1952 = vmatpush1.msra.mxu0 0.0
      %1953 = vmatprep.subr.mxu0 0.0
      %1954 = vmatpush1.msra.mxu0 0.0
      %1955 = vmatprep.subr.mxu0 0.0
      %1956 = vmatpush1.msra.mxu0 0.0
      %1957 = vmatprep.subr.mxu0 0.0
      %1958 = vmatpush1.msra.mxu0 0.0
      %1959 = vmatprep.subr.mxu0 0.0
      %1960 = vmatpush1.msra.mxu0 0.0
      %1961 = vmatprep.subr.mxu0 0.0
      %1962 = vmatpush1.msra.mxu0 0.0
      %1963 = vmatprep.mubr.f32.mxu0 0.0
      %1964 = vmatmul.mubr.f32.gmra.mrb[0].mxu0 %v1897
      %v1965 = vpop.f32.mrb[0].mxu0
      %v1966 = vadd.f32 0.0, %v1965
      %v1967 = vpop.f32.mrb[0].mxu0
      %1968 = vdwg.mxu0
      %v1970 = vsel %vm1603, %v1600, 0
      %1972 = vmatprep.subr.mxu0 0.0
      %1973 = vmatpush1.msra.mxu0 %v564
      %1974 = vmatprep.subr.mxu0 0.0
      %1975 = vmatpush1.msra.mxu0 %v567
      %1976 = vmatprep.subr.mxu0 0.0
      %1977 = vmatpush1.msra.mxu0 0.0
      %1978 = vmatprep.subr.mxu0 0.0
      %1979 = vmatpush1.msra.mxu0 0.0
      %1980 = vmatprep.subr.mxu0 0.0
      %1981 = vmatpush1.msra.mxu0 0.0
      %1982 = vmatprep.subr.mxu0 0.0
      %1983 = vmatpush1.msra.mxu0 0.0
      %1984 = vmatprep.subr.mxu0 0.0
      %1985 = vmatpush1.msra.mxu0 0.0
      %1986 = vmatprep.subr.mxu0 0.0
      %1987 = vmatpush1.msra.mxu0 0.0
      %1988 = vmatprep.subr.mxu0 0.0
      %1989 = vmatpush1.msra.mxu0 0.0
      %1990 = vmatprep.subr.mxu0 0.0
      %1991 = vmatpush1.msra.mxu0 0.0
      %1992 = vmatprep.subr.mxu0 0.0
      %1993 = vmatpush1.msra.mxu0 0.0
      %1994 = vmatprep.subr.mxu0 0.0
      %1995 = vmatpush1.msra.mxu0 0.0
      %1996 = vmatprep.subr.mxu0 0.0
      %1997 = vmatpush1.msra.mxu0 0.0
      %1998 = vmatprep.subr.mxu0 0.0
      %1999 = vmatpush1.msra.mxu0 0.0
      %2000 = vmatprep.subr.mxu0 0.0
      %2001 = vmatpush1.msra.mxu0 0.0
      %2002 = vmatprep.subr.mxu0 0.0
      %2003 = vmatpush1.msra.mxu0 0.0
      %2004 = vmatprep.subr.mxu0 0.0
      %2005 = vmatpush1.msra.mxu0 0.0
      %2006 = vmatprep.subr.mxu0 0.0
      %2007 = vmatpush1.msra.mxu0 0.0
      %2008 = vmatprep.subr.mxu0 0.0
      %2009 = vmatpush1.msra.mxu0 0.0
      %2010 = vmatprep.subr.mxu0 0.0
      %2011 = vmatpush1.msra.mxu0 0.0
      %2012 = vmatprep.subr.mxu0 0.0
      %2013 = vmatpush1.msra.mxu0 0.0
      %2014 = vmatprep.subr.mxu0 0.0
      %2015 = vmatpush1.msra.mxu0 0.0
      %2016 = vmatprep.subr.mxu0 0.0
      %2017 = vmatpush1.msra.mxu0 0.0
      %2018 = vmatprep.subr.mxu0 0.0
      %2019 = vmatpush1.msra.mxu0 0.0
      %2020 = vmatprep.subr.mxu0 0.0
      %2021 = vmatpush1.msra.mxu0 0.0
      %2022 = vmatprep.subr.mxu0 0.0
      %2023 = vmatpush1.msra.mxu0 0.0
      %2024 = vmatprep.subr.mxu0 0.0
      %2025 = vmatpush1.msra.mxu0 0.0
      %2026 = vmatprep.subr.mxu0 0.0
      %2027 = vmatpush1.msra.mxu0 0.0
      %2028 = vmatprep.subr.mxu0 0.0
      %2029 = vmatpush1.msra.mxu0 0.0
      %2030 = vmatprep.subr.mxu0 0.0
      %2031 = vmatpush1.msra.mxu0 0.0
      %2032 = vmatprep.subr.mxu0 0.0
      %2033 = vmatpush1.msra.mxu0 0.0
      %2034 = vmatprep.subr.mxu0 0.0
      %2035 = vmatpush1.msra.mxu0 0.0
      %2036 = vmatprep.mubr.f32.mxu0 0.0
      %2037 = vmatmul.mubr.f32.gmra.mrb[0].mxu0 %v1970
      %v2038 = vpop.f32.mrb[0].mxu0
      %v2039 = vadd.f32 0.0, %v2038
      %v2040 = vpop.f32.mrb[0].mxu0
      %2041 = vdwg.mxu0
      %v2043 = vsel %vm1603, %v1601, 0
      %2045 = vmatprep.subr.mxu0 0.0
      %2046 = vmatpush1.msra.mxu0 %v572
      %2047 = vmatprep.subr.mxu0 0.0
      %2048 = vmatpush1.msra.mxu0 %v575
      %2049 = vmatprep.subr.mxu0 0.0
      %2050 = vmatpush1.msra.mxu0 0.0
      %2051 = vmatprep.subr.mxu0 0.0
      %2052 = vmatpush1.msra.mxu0 0.0
      %2053 = vmatprep.subr.mxu0 0.0
      %2054 = vmatpush1.msra.mxu0 0.0
      %2055 = vmatprep.subr.mxu0 0.0
      %2056 = vmatpush1.msra.mxu0 0.0
      %2057 = vmatprep.subr.mxu0 0.0
      %2058 = vmatpush1.msra.mxu0 0.0
      %2059 = vmatprep.subr.mxu0 0.0
      %2060 = vmatpush1.msra.mxu0 0.0
      %2061 = vmatprep.subr.mxu0 0.0
      %2062 = vmatpush1.msra.mxu0 0.0
      %2063 = vmatprep.subr.mxu0 0.0
      %2064 = vmatpush1.msra.mxu0 0.0
      %2065 = vmatprep.subr.mxu0 0.0
      %2066 = vmatpush1.msra.mxu0 0.0
      %2067 = vmatprep.subr.mxu0 0.0
      %2068 = vmatpush1.msra.mxu0 0.0
      %2069 = vmatprep.subr.mxu0 0.0
      %2070 = vmatpush1.msra.mxu0 0.0
      %2071 = vmatprep.subr.mxu0 0.0
      %2072 = vmatpush1.msra.mxu0 0.0
      %2073 = vmatprep.subr.mxu0 0.0
      %2074 = vmatpush1.msra.mxu0 0.0
      %2075 = vmatprep.subr.mxu0 0.0
      %2076 = vmatpush1.msra.mxu0 0.0
      %2077 = vmatprep.subr.mxu0 0.0
      %2078 = vmatpush1.msra.mxu0 0.0
      %2079 = vmatprep.subr.mxu0 0.0
      %2080 = vmatpush1.msra.mxu0 0.0
      %2081 = vmatprep.subr.mxu0 0.0
      %2082 = vmatpush1.msra.mxu0 0.0
      %2083 = vmatprep.subr.mxu0 0.0
      %2084 = vmatpush1.msra.mxu0 0.0
      %2085 = vmatprep.subr.mxu0 0.0
      %2086 = vmatpush1.msra.mxu0 0.0
      %2087 = vmatprep.subr.mxu0 0.0
      %2088 = vmatpush1.msra.mxu0 0.0
      %2089 = vmatprep.subr.mxu0 0.0
      %2090 = vmatpush1.msra.mxu0 0.0
      %2091 = vmatprep.subr.mxu0 0.0
      %2092 = vmatpush1.msra.mxu0 0.0
      %2093 = vmatprep.subr.mxu0 0.0
      %2094 = vmatpush1.msra.mxu0 0.0
      %2095 = vmatprep.subr.mxu0 0.0
      %2096 = vmatpush1.msra.mxu0 0.0
      %2097 = vmatprep.subr.mxu0 0.0
      %2098 = vmatpush1.msra.mxu0 0.0
      %2099 = vmatprep.subr.mxu0 0.0
      %2100 = vmatpush1.msra.mxu0 0.0
      %2101 = vmatprep.subr.mxu0 0.0
      %2102 = vmatpush1.msra.mxu0 0.0
      %2103 = vmatprep.subr.mxu0 0.0
      %2104 = vmatpush1.msra.mxu0 0.0
      %2105 = vmatprep.subr.mxu0 0.0
      %2106 = vmatpush1.msra.mxu0 0.0
      %2107 = vmatprep.subr.mxu0 0.0
      %2108 = vmatpush1.msra.mxu0 0.0
      %2109 = vmatprep.mubr.f32.mxu0 0.0
      %2110 = vmatmul.mubr.f32.gmra.mrb[0].mxu0 %v2043
      %v2111 = vpop.f32.mrb[0].mxu0
      %v2112 = vadd.f32 0.0, %v2111
      %v2113 = vpop.f32.mrb[0].mxu0
      %2114 = vdwg.mxu0
      %v2116 = vsel %vm1603, %v1602, 0
      %2118 = vmatprep.subr.mxu0 0.0
      %2119 = vmatpush1.msra.mxu0 %v580
      %2120 = vmatprep.subr.mxu0 0.0
      %2121 = vmatpush1.msra.mxu0 %v583
      %2122 = vmatprep.subr.mxu0 0.0
      %2123 = vmatpush1.msra.mxu0 0.0
      %2124 = vmatprep.subr.mxu0 0.0
      %2125 = vmatpush1.msra.mxu0 0.0
      %2126 = vmatprep.subr.mxu0 0.0
      %2127 = vmatpush1.msra.mxu0 0.0
      %2128 = vmatprep.subr.mxu0 0.0
      %2129 = vmatpush1.msra.mxu0 0.0
      %2130 = vmatprep.subr.mxu0 0.0
      %2131 = vmatpush1.msra.mxu0 0.0
      %2132 = vmatprep.subr.mxu0 0.0
      %2133 = vmatpush1.msra.mxu0 0.0
      %2134 = vmatprep.subr.mxu0 0.0
      %2135 = vmatpush1.msra.mxu0 0.0
      %2136 = vmatprep.subr.mxu0 0.0
      %2137 = vmatpush1.msra.mxu0 0.0
      %2138 = vmatprep.subr.mxu0 0.0
      %2139 = vmatpush1.msra.mxu0 0.0
      %2140 = vmatprep.subr.mxu0 0.0
      %2141 = vmatpush1.msra.mxu0 0.0
      %2142 = vmatprep.subr.mxu0 0.0
      %2143 = vmatpush1.msra.mxu0 0.0
      %2144 = vmatprep.subr.mxu0 0.0
      %2145 = vmatpush1.msra.mxu0 0.0
      %2146 = vmatprep.subr.mxu0 0.0
      %2147 = vmatpush1.msra.mxu0 0.0
      %2148 = vmatprep.subr.mxu0 0.0
      %2149 = vmatpush1.msra.mxu0 0.0
      %2150 = vmatprep.subr.mxu0 0.0
      %2151 = vmatpush1.msra.mxu0 0.0
      %2152 = vmatprep.subr.mxu0 0.0
      %2153 = vmatpush1.msra.mxu0 0.0
      %2154 = vmatprep.subr.mxu0 0.0
      %2155 = vmatpush1.msra.mxu0 0.0
      %2156 = vmatprep.subr.mxu0 0.0
      %2157 = vmatpush1.msra.mxu0 0.0
      %2158 = vmatprep.subr.mxu0 0.0
      %2159 = vmatpush1.msra.mxu0 0.0
      %2160 = vmatprep.subr.mxu0 0.0
      %2161 = vmatpush1.msra.mxu0 0.0
      %2162 = vmatprep.subr.mxu0 0.0
      %2163 = vmatpush1.msra.mxu0 0.0
      %2164 = vmatprep.subr.mxu0 0.0
      %2165 = vmatpush1.msra.mxu0 0.0
      %2166 = vmatprep.subr.mxu0 0.0
      %2167 = vmatpush1.msra.mxu0 0.0
      %2168 = vmatprep.subr.mxu0 0.0
      %2169 = vmatpush1.msra.mxu0 0.0
      %2170 = vmatprep.subr.mxu0 0.0
      %2171 = vmatpush1.msra.mxu0 0.0
      %2172 = vmatprep.subr.mxu0 0.0
      %2173 = vmatpush1.msra.mxu0 0.0
      %2174 = vmatprep.subr.mxu0 0.0
      %2175 = vmatpush1.msra.mxu0 0.0
      %2176 = vmatprep.subr.mxu0 0.0
      %2177 = vmatpush1.msra.mxu0 0.0
      %2178 = vmatprep.subr.mxu0 0.0
      %2179 = vmatpush1.msra.mxu0 0.0
      %2180 = vmatprep.subr.mxu0 0.0
      %2181 = vmatpush1.msra.mxu0 0.0
      %2182 = vmatprep.mubr.f32.mxu0 0.0
      %2183 = vmatmul.mubr.f32.gmra.mrb[0].mxu0 %v2116
      %v2184 = vpop.f32.mrb[0].mxu0
      %v2185 = vadd.f32 0.0, %v2184
      %v2186 = vpop.f32.mrb[0].mxu0
      %2187 = vdwg.mxu0
      %v2188 = vmul.f32 %v678, %v678
      %v2189 = vmul.f32 %v679, %v679
      %v2190 = vmul.f32 %v680, %v680
      %v2191 = vmul.f32 %v681, %v681
      %v2192 = vmul.f32 %v682, %v682
      %v2193 = vmul.f32 %v683, %v683
      %v2194 = vmul.f32 %v684, %v684
      %v2195 = vmul.f32 %v685, %v685
      %vm2196 = vcmask 258048
      %v2197 = vsel %vm2196, %v2188, 0.0
      %2198 = vadd.xlane.f32.xlu0 %v2197
      %v2199 = vpop.xlane.xlu0 %2198
      %v2200 = vsel %vm2196, %v2189, 0.0
      %2201 = vadd.xlane.f32.xlu0 %v2200
      %v2202 = vpop.xlane.xlu0 %2201
      %v2203 = vsel %vm2196, %v2190, 0.0
      %2204 = vadd.xlane.f32.xlu0 %v2203
      %v2205 = vpop.xlane.xlu0 %2204
      %v2206 = vsel %vm2196, %v2191, 0.0
      %2207 = vadd.xlane.f32.xlu0 %v2206
      %v2208 = vpop.xlane.xlu0 %2207
      %v2209 = vsel %vm2196, %v2192, 0.0
      %2210 = vadd.xlane.f32.xlu0 %v2209
      %v2211 = vpop.xlane.xlu0 %2210
      %v2212 = vsel %vm2196, %v2193, 0.0
      %2213 = vadd.xlane.f32.xlu0 %v2212
      %v2214 = vpop.xlane.xlu0 %2213
      %v2215 = vsel %vm2196, %v2194, 0.0
      %2216 = vadd.xlane.f32.xlu0 %v2215
      %v2217 = vpop.xlane.xlu0 %2216
      %v2218 = vsel %vm2196, %v2195, 0.0
      %2219 = vadd.xlane.f32.xlu0 %v2218
      %v2220 = vpop.xlane.xlu0 %2219
      %v2221 = vmax.f32 %v2199, 1e-24
      %v2222 = vmax.f32 %v2202, 1e-24
      %v2223 = vmax.f32 %v2205, 1e-24
      %v2224 = vmax.f32 %v2208, 1e-24
      %v2225 = vmax.f32 %v2211, 1e-24
      %v2226 = vmax.f32 %v2214, 1e-24
      %v2227 = vmax.f32 %v2217, 1e-24
      %v2228 = vmax.f32 %v2220, 1e-24
      %v2229 = vrsqrt.pop %v2221
      %v2230 = vrsqrt.pop %v2222
      %v2231 = vrsqrt.pop %v2223
      %v2232 = vrsqrt.pop %v2224
      %v2233 = vrsqrt.pop %v2225
      %v2234 = vrsqrt.pop %v2226
      %v2235 = vrsqrt.pop %v2227
      %v2236 = vrsqrt.pop %v2228
      %v2237 = vmul.f32 %v678, %v2229
      %v2238 = vmul.f32 %v679, %v2230
      %v2239 = vmul.f32 %v680, %v2231
      %v2240 = vmul.f32 %v681, %v2232
      %v2241 = vmul.f32 %v682, %v2233
      %v2242 = vmul.f32 %v683, %v2234
      %v2243 = vmul.f32 %v684, %v2235
      %v2244 = vmul.f32 %v685, %v2236
      %2245 = vst.msk [vmem:[%s264] sm:$0x1f] %vm2196, %v2237
      %2246 = vst.msk [vmem:[%s264 + $0x8] sm:$0x1f] %vm2196, %v2238
      %2247 = vst.msk [vmem:[%s264 + $0x10] sm:$0x1f] %vm2196, %v2239
      %2248 = vst.msk [vmem:[%s264 + $0x18] sm:$0x1f] %vm2196, %v2240
      %2249 = vst.msk [vmem:[%s264 + $0x20] sm:$0x1f] %vm2196, %v2241
      %2250 = vst.msk [vmem:[%s264 + $0x28] sm:$0x1f] %vm2196, %v2242
      %2251 = vst.msk [vmem:[%s264 + $0x30] sm:$0x1f] %vm2196, %v2243
      %2252 = vst.msk [vmem:[%s264 + $0x38] sm:$0x1f] %vm2196, %v2244
      %v2253 = vmul.f32 %v1674, %v1674
      %v2254 = vmul.f32 %v1747, %v1747
      %v2255 = vmul.f32 %v1820, %v1820
      %v2256 = vmul.f32 %v1893, %v1893
      %v2257 = vmul.f32 %v1966, %v1966
      %v2258 = vmul.f32 %v2039, %v2039
      %v2259 = vmul.f32 %v2112, %v2112
      %v2260 = vmul.f32 %v2185, %v2185
      %v2261 = vsel %vm2196, %v2253, 0.0
      %2262 = vadd.xlane.f32.xlu0 %v2261
      %v2263 = vpop.xlane.xlu0 %2262
      %v2264 = vsel %vm2196, %v2254, 0.0
      %2265 = vadd.xlane.f32.xlu0 %v2264
      %v2266 = vpop.xlane.xlu0 %2265
      %v2267 = vsel %vm2196, %v2255, 0.0
      %2268 = vadd.xlane.f32.xlu0 %v2267
      %v2269 = vpop.xlane.xlu0 %2268
      %v2270 = vsel %vm2196, %v2256, 0.0
      %2271 = vadd.xlane.f32.xlu0 %v2270
      %v2272 = vpop.xlane.xlu0 %2271
      %v2273 = vsel %vm2196, %v2257, 0.0
      %2274 = vadd.xlane.f32.xlu0 %v2273
      %v2275 = vpop.xlane.xlu0 %2274
      %v2276 = vsel %vm2196, %v2258, 0.0
      %2277 = vadd.xlane.f32.xlu0 %v2276
      %v2278 = vpop.xlane.xlu0 %2277
      %v2279 = vsel %vm2196, %v2259, 0.0
      %2280 = vadd.xlane.f32.xlu0 %v2279
      %v2281 = vpop.xlane.xlu0 %2280
      %v2282 = vsel %vm2196, %v2260, 0.0
      %2283 = vadd.xlane.f32.xlu0 %v2282
      %v2284 = vpop.xlane.xlu0 %2283
      %v2285 = vmax.f32 %v2263, 1e-24
      %v2286 = vmax.f32 %v2266, 1e-24
      %v2287 = vmax.f32 %v2269, 1e-24
      %v2288 = vmax.f32 %v2272, 1e-24
      %v2289 = vmax.f32 %v2275, 1e-24
      %v2290 = vmax.f32 %v2278, 1e-24
      %v2291 = vmax.f32 %v2281, 1e-24
      %v2292 = vmax.f32 %v2284, 1e-24
      %v2293 = vrsqrt.pop %v2285
      %v2294 = vrsqrt.pop %v2286
      %v2295 = vrsqrt.pop %v2287
      %v2296 = vrsqrt.pop %v2288
      %v2297 = vrsqrt.pop %v2289
      %v2298 = vrsqrt.pop %v2290
      %v2299 = vrsqrt.pop %v2291
      %v2300 = vrsqrt.pop %v2292
      %v2301 = vmul.f32 %v1674, %v2293
      %v2302 = vmul.f32 %v1747, %v2294
      %v2303 = vmul.f32 %v1820, %v2295
      %v2304 = vmul.f32 %v1893, %v2296
      %v2305 = vmul.f32 %v1966, %v2297
      %v2306 = vmul.f32 %v2039, %v2298
      %v2307 = vmul.f32 %v2112, %v2299
      %v2308 = vmul.f32 %v2185, %v2300
      %2309 = vst.msk [vmem:[%s270] sm:$0x1f] %vm2196, %v2301
      %2310 = vst.msk [vmem:[%s270 + $0x8] sm:$0x1f] %vm2196, %v2302
      %2311 = vst.msk [vmem:[%s270 + $0x10] sm:$0x1f] %vm2196, %v2303
      %2312 = vst.msk [vmem:[%s270 + $0x18] sm:$0x1f] %vm2196, %v2304
      %2313 = vst.msk [vmem:[%s270 + $0x20] sm:$0x1f] %vm2196, %v2305
      %2314 = vst.msk [vmem:[%s270 + $0x28] sm:$0x1f] %vm2196, %v2306
      %2315 = vst.msk [vmem:[%s270 + $0x30] sm:$0x1f] %vm2196, %v2307
      %2316 = vst.msk [vmem:[%s270 + $0x38] sm:$0x1f] %vm2196, %v2308
      %s2317 = smul.u32 8, %s18
      %p2318 = scmp.lt.s32.totalorder %s2317, 15
      %s2319 = scalar_select %p2318, %s2317, 15
      %s2320 = smul.addr %s2319, 8
      %s2321 = scalar_lea.vmem %s5, %s2320
      %s2322 = smul.u32 8, %s18
      %p2323 = scmp.lt.s32.totalorder %s2322, 15
      %s2324 = scalar_select %p2323, %s2322, 15
      %s2325 = smul.addr %s2324, 8
      %s2326 = scalar_lea.vmem %s6, %s2325
      // Predicated region
      $region41: #{multivector_encoder.1} parent=39 // pred_check
        %p2327 = pneg %p146
      $region42: #{multivector_encoder.1} parent=39 // pred_check_branch
        %2329 = sbr.rel (%p2327) target = $region44
      $region43: #{multivector_encoder.1} parent=39 // pred_region
        %s2330 = smul.u32 8, %s18
      $region44: #{multivector_encoder.1} parent=39 // pred_fallthru
        _
      // Predicated region
      $region45: #{multivector_encoder.1} parent=39 // pred_check
        %p2331 = pneg %p172
      $region46: #{multivector_encoder.1} parent=39 // pred_check_branch
        %2333 = sbr.rel (%p2331) target = $region48
      $region47: #{multivector_encoder.1} parent=39 // pred_region
        %s2334 = smul.u32 8, %s18
      $region48: #{multivector_encoder.1} parent=39 // pred_fallthru
        _
    $region40: #{multivector_encoder.1} parent=5 // pred_fallthru
      _
    %p2335 = scmp.le.s32.totalorder 2, %s13
    // Predicated region
    $region49: #{multivector_encoder.1} parent=5 // pred_check
      %p2336 = pneg %p2335
    $region50: #{multivector_encoder.1} parent=5 // pred_check_branch
      %2338 = sbr.rel (%p2336) target = $region52
    $region51: #{multivector_encoder.1} parent=5 // pred_region
      %s2339 = ssub.s32 %s13, 2
      // Predicated region
      $region53: #{multivector_encoder.1} parent=51 // pred_check
        %p2340 = pneg %p152
      $region54: #{multivector_encoder.1} parent=51 // pred_check_branch
        %2342 = sbr.rel (%p2340) target = $region56
      $region55: #{multivector_encoder.1} parent=51 // pred_region
        %s2343 = smul.u32 8, %s19
        %p2344 = scmp.lt.s32.totalorder %s2343, 15
        %s2345 = scalar_select %p2344, %s2343, 15
        %s2346 = smul.addr %s2345, 8
        %s2347 = scalar_lea.vmem %s5, %s2346
      $region56: #{multivector_encoder.1} parent=51 // pred_fallthru
        _
      // Predicated region
      $region57: #{multivector_encoder.1} parent=51 // pred_check
        %p2348 = pneg %p178
      $region58: #{multivector_encoder.1} parent=51 // pred_check_branch
        %2350 = sbr.rel (%p2348) target = $region60
      $region59: #{multivector_encoder.1} parent=51 // pred_region
        %s2351 = smul.u32 8, %s19
        %p2352 = scmp.lt.s32.totalorder %s2351, 15
        %s2353 = scalar_select %p2352, %s2351, 15
        %s2354 = smul.addr %s2353, 8
        %s2355 = scalar_lea.vmem %s6, %s2354
      $region60: #{multivector_encoder.1} parent=51 // pred_fallthru
        _
    $region52: #{multivector_encoder.1} parent=5 // pred_fallthru
      _
  $region6: #{multivector_encoder.1} parent=0 // loop_footer
    %s17 = sadd.s32 1, %s13
  $region7: #{multivector_encoder.1} parent=0 // loop_footer_branch
    %12 = sbr.rel target = $region3
  $region8: #{multivector_encoder.1} parent=0 // loop_exit
    _

</llo_original>
